<compile_context>
chip_gen: v7x
topology: tpu7x:2x2x1
jax: 0.10.0
libtpu: 0.0.40
codegen_flags: <defaults>
</compile_context>

<pallas_src>
import math
from functools import partial

import jax
import jax.numpy as jnp
from jax.experimental import pallas as pl
from jax.experimental.pallas import tpu as pltpu

BN_EPS = 1e-5


def calculate_mask_index(kernel_length_now, largest_kernel_length):
    right = math.ceil((largest_kernel_length - 1) / 2) - math.ceil(
        (kernel_length_now - 1) / 2)
    left = largest_kernel_length - kernel_length_now - right
    return left, left + kernel_length_now


def layer_parameter_list_input_change(layer_parameter_list, input_channel):
    new_list = []
    for i, layer in enumerate(layer_parameter_list):
        if i == 0:
            new_list.append([(input_channel, p[1], p[2]) for p in layer])
        else:
            new_list.append(layer)
    return new_list


# ------------------------------- fused kernel -------------------------------

def _batchnorm_train(z):
    """nn.BatchNorm1d training-mode normalization (gamma=1, beta=0).

    Two-pass E[(x - mu)^2] variance (no E[x^2]-mu^2 cancellation); reuses the
    centered accumulator so the activation is not re-read.
    """
    mu = jnp.mean(z, axis=0, keepdims=True)
    d = z - mu
    var = jnp.mean(d * d, axis=0, keepdims=True)
    return d * jax.lax.rsqrt(var + BN_EPS)


def _res_os_kernel(x_ref, *refs, layer_specs, N, L, cres):
    """One Res_OS_layer, fully fused, channels-last in and out.

    x_ref : (N, L, Cin) input.
    refs  : per-OS-layer packed conv weights (f32 (K, Cout) when Cin==1 else
            bf16 (K*Cin, Cout)), shortcut weight (Cin, Cres), output
            (N, L, Cres).  No scratch buffers.
    """
    n_os = len(layer_specs)
    w_refs = refs[:n_os]
    wres_ref = refs[n_os]
    out_ref = refs[n_os + 1]

    NL = N * L
    cin = layer_specs[0][0]
    x_flat = x_ref[...].reshape(NL, cin)          # channels-last, flat (N*L, Cin)

    # Position-within-sample index, used to mask the "same"-padding taps.
    pos = jax.lax.broadcasted_iota(jnp.int32, (NL, 1), 0) % L

    def shifted_tap(h, s):
        """tap[n*L+t, :] = h[n*L+t+s, :] if 0 <= t+s < L else 0 (vreg-resident)."""
        if s == 0:
            return h
        rolled = pltpu.roll(h, (-s) % NL, axis=0)        # XLU sublane rotate
        valid = jnp.logical_and(pos + s >= 0, pos + s < L)
        return jnp.where(valid, rolled, 0.0)

    # ---- OS block: masked conv ("same" pad) + train-mode BN (+ ReLU) ----
    h = x_flat
    for l, (ci, co, K) in enumerate(layer_specs):
        pad_left = (K - 1) // 2                    # ConstantPad1d((K-1)//2, K//2)
        taps = [shifted_tap(h, k - pad_left) for k in range(K)]
        if ci == 1:
            # Contraction length 1: outer product -> VPU broadcast MAC (f32).
            w0 = w_refs[l][...]                    # (K, co) f32
            z = jnp.zeros((NL, co), jnp.float32)
            for k in range(K):
                z = z + taps[k] * w0[k:k + 1, :]   # (NL,1)*(1,co) broadcast
        else:
            # im2col slab (N*L, K*ci) -> single wide-contraction bf16 MXU matmul.
            slab = jnp.concatenate(taps, axis=-1).astype(jnp.bfloat16)
            z = jnp.dot(slab, w_refs[l][...],
                        preferred_element_type=jnp.float32)
        # Conv bias omitted: exactly cancelled by the BN mean subtraction.
        h = _batchnorm_train(z)
        if l < n_os - 1:                           # no ReLU on last OS layer
            h = jnp.maximum(h, 0.0)

    # ---- shortcut: SampaddingConv1D_BN, kernel_size=1 (no pad, no ReLU) ----
    if cin == 1:
        sc_pre = x_flat * wres_ref[...]            # (NL,1)*(1,cres) VPU broadcast
    else:
        sc_pre = jnp.dot(x_flat.astype(jnp.bfloat16), wres_ref[...],
                         preferred_element_type=jnp.float32)
    sc = _batchnorm_train(sc_pre)

    # relu(shortcut + temp), stored channels-last (lane-dense, no transpose).
    out_ref[...] = jnp.maximum(h + sc, 0.0).reshape(N, L, cres)


def res_os_layer_forward_nlc(x_nlc, params):
    """Apply one fused Res_OS_layer to an (N, L, Cin) channels-last input."""
    layer_specs, w_list, w_res = params
    N, L, cin = x_nlc.shape
    cres = w_res.shape[-1]
    assert cin == layer_specs[0][0]
    assert cres == layer_specs[-1][1], "residual add needs matching channels"

    vmem = pl.BlockSpec(memory_space=pltpu.MemorySpace.VMEM)
    kernel = partial(_res_os_kernel, layer_specs=layer_specs, N=N, L=L, cres=cres)
    return pl.pallas_call(
        kernel,
        out_shape=jax.ShapeDtypeStruct((N, L, cres), jnp.float32),
        in_specs=[vmem] * (1 + len(w_list) + 1),
        out_specs=vmem,
    )(x_nlc, *w_list, w_res)


# --------------------------- parameter construction --------------------------

def build_os_layer_weights(key, layer_parameters):
    """Concatenated, mask-zeroed conv weight for one OS layer.

    Packed for the kernel: f32 (K, Cout) when Cin==1 (VPU path), otherwise
    bf16 (K*Cin, Cout) matching the in-kernel im2col slab column order.
    """
    K = layer_parameters[-1][-1]                 # largest kernel in this layer
    ws = []
    for (ci, co, k) in layer_parameters:
        key, k1 = jax.random.split(key)
        bound = 1.0 / math.sqrt(ci * k)          # Conv1d default init range
        w = jax.random.uniform(k1, (co, ci, k), jnp.float32, -bound, bound)
        il, ir = calculate_mask_index(k, K)
        big = jnp.zeros((co, ci, K), jnp.float32).at[:, :, il:ir].set(w)
        ws.append(big)                           # masked taps stay exactly zero
    w_full = jnp.concatenate(ws, axis=0)         # (Cout_total, Cin, K)
    cin = layer_parameters[0][0]
    cout = sum(p[1] for p in layer_parameters)
    w_kio = jnp.transpose(w_full, (2, 1, 0))     # (K, Cin, Cout)
    if cin == 1:
        w_packed = w_kio.reshape(K, cout)                          # f32, VPU path
    else:
        w_packed = w_kio.reshape(K * cin, cout).astype(jnp.bfloat16)  # MXU path
    return key, w_packed, (cin, cout, K)


def build_res_layer_params(key, layer_parameter_list):
    layer_specs, w_list = [], []
    for lp in layer_parameter_list:
        key, w, spec = build_os_layer_weights(key, lp)
        w_list.append(w)
        layer_specs.append(spec)
    cin = layer_specs[0][0]
    cres = layer_specs[-1][1]
    key, kr = jax.random.split(key)
    bound = 1.0 / math.sqrt(cin)                 # 1x1 shortcut Conv1d init range
    w_res = jax.random.uniform(kr, (cin, cres), jnp.float32, -bound, bound)
    if cin > 1:
        w_res = w_res.astype(jnp.bfloat16)       # MXU path operand
    # Conv biases are not generated: with train-mode BN (beta=0) they cancel.
    return key, (tuple(layer_specs), w_list, w_res)


# ------------------------------------ main -----------------------------------

if __name__ == "__main__":
    layer_parameter_list = [
        [(1, 4, 1), (1, 4, 3), (1, 4, 5)],       # -> 12 channels, max K = 5
        [(12, 4, 1), (12, 4, 3), (12, 4, 5)],    # -> 12 channels, max K = 5
        [(12, 4, 1), (12, 4, 3)],                # -> 8 channels,  max K = 3
    ]
    n_layers = 2        # exercises the Cin=1 VPU path, the bf16 MXU path, and
                        # NLC chaining between stacked Res_OS_layers
    N, C_in, L = 2, 1, 16
    out_channels = sum(p[1] for p in layer_parameter_list[-1])   # = 8

    key = jax.random.PRNGKey(0)
    key, kx = jax.random.split(key)
    x_ncl = jax.random.normal(kx, (N, C_in, L), jnp.float32)

    res_params = []
    key, p0 = build_res_layer_params(key, layer_parameter_list)
    res_params.append(p0)
    if n_layers > 1:
        new_list = layer_parameter_list_input_change(layer_parameter_list,
                                                     out_channels)
        for _ in range(n_layers - 1):
            key, pi = build_res_layer_params(key, new_list)
            res_params.append(pi)

    @jax.jit
    def forward(x):
        h = jnp.transpose(x, (0, 2, 1))            # single NCL->NLC at the entry
        for prm in res_params:
            h = res_os_layer_forward_nlc(h, prm)   # layers chain channels-last
        return jnp.transpose(h, (0, 2, 1))         # single NLC->NCL at the exit

    out = forward(x_ncl)
    jax.block_until_ready(out)
    assert out.shape == (N, out_channels, L)
    assert bool(jnp.all(jnp.isfinite(out)))
    print("KERNEL_OK")
</pallas_src>

<mosaic_0001>
module attributes {stable_mosaic.version = 11 : i64} {
  func.func @_res_os_kernel(%arg0: memref<2x16x8xf32, #tpu.memory_space<vmem>>, %arg1: memref<40x12xbf16, #tpu.memory_space<vmem>>, %arg2: memref<60x12xbf16, #tpu.memory_space<vmem>>, %arg3: memref<36x8xbf16, #tpu.memory_space<vmem>>, %arg4: memref<8x8xbf16, #tpu.memory_space<vmem>>, %arg5: memref<2x16x8xf32, #tpu.memory_space<vmem>>) attributes {dimension_semantics = [], scalar_prefetch = 0 : i64, scratch_operands = 0 : i64, tpu.core_type = #tpu.core_type<tc>} {
    %c0 = arith.constant 0 : index
    %c0_0 = arith.constant 0 : index
    %c0_1 = arith.constant 0 : index
    %0 = vector.load %arg0[%c0, %c0_0, %c0_1] : memref<2x16x8xf32, #tpu.memory_space<vmem>>, vector<2x16x8xf32>
    %1 = vector.shape_cast %0 : vector<2x16x8xf32> to vector<32x8xf32>
    %2 = tpu.iota {dimensions = array<i32: 0>} : vector<32x1xi32>
    %c16_i32 = arith.constant 16 : i32
    %c0_i32 = arith.constant 0 : i32
    %3 = arith.cmpi eq, %c16_i32, %c0_i32 : i32
    %c1_i32 = arith.constant 1 : i32
    %4 = arith.select %3, %c1_i32, %c16_i32 : i32
    %5 = vector.broadcast %4 : i32 to vector<32x1xi32>
    %6 = arith.remsi %2, %5 : vector<32x1xi32>
    %c0_i32_2 = arith.constant 0 : i32
    %7 = vector.broadcast %c0_i32_2 : i32 to vector<32x1xi32>
    %8 = arith.cmpi ne, %6, %7 : vector<32x1xi32>
    %c0_i32_3 = arith.constant 0 : i32
    %9 = vector.broadcast %c0_i32_3 : i32 to vector<32x1xi32>
    %10 = arith.cmpi slt, %6, %9 : vector<32x1xi32>
    %c0_i32_4 = arith.constant 0 : i32
    %11 = arith.cmpi slt, %4, %c0_i32_4 : i32
    %12 = vector.broadcast %11 : i1 to vector<32x1xi1>
    %13 = vector.broadcast %12 : vector<32x1xi1> to vector<32x1xi1>
    %14 = arith.xori %10, %13 : vector<32x1xi1>
    %15 = arith.andi %14, %8 : vector<32x1xi1>
    %16 = vector.broadcast %4 : i32 to vector<32x1xi32>
    %17 = arith.addi %6, %16 : vector<32x1xi32>
    %18 = arith.select %15, %17, %6 : vector<32x1xi1>, vector<32x1xi32>
    %c2_i32 = arith.constant 2 : i32
    %19 = tpu.dynamic_rotate %1 by %c2_i32 dim 0 : vector<32x8xf32>, i32 -> vector<32x8xf32>
    %c-2_i32 = arith.constant -2 : i32
    %20 = vector.broadcast %c-2_i32 : i32 to vector<32x1xi32>
    %21 = arith.addi %18, %20 : vector<32x1xi32>
    %c0_i32_5 = arith.constant 0 : i32
    %22 = vector.broadcast %c0_i32_5 : i32 to vector<32x1xi32>
    %23 = arith.cmpi sge, %21, %22 : vector<32x1xi32>
    %c-2_i32_6 = arith.constant -2 : i32
    %24 = vector.broadcast %c-2_i32_6 : i32 to vector<32x1xi32>
    %25 = arith.addi %18, %24 : vector<32x1xi32>
    %c16_i32_7 = arith.constant 16 : i32
    %26 = vector.broadcast %c16_i32_7 : i32 to vector<32x1xi32>
    %27 = arith.cmpi slt, %25, %26 : vector<32x1xi32>
    %28 = arith.andi %23, %27 : vector<32x1xi1>
    %cst = arith.constant 0.000000e+00 : f32
    %29 = vector.shape_cast %28 : vector<32x1xi1> to vector<32x1xi1>
    %30 = vector.broadcast %29 : vector<32x1xi1> to vector<32x8xi1>
    %31 = vector.broadcast %cst : f32 to vector<32x8xf32>
    %32 = arith.select %30, %19, %31 : vector<32x8xi1>, vector<32x8xf32>
    %c1_i32_8 = arith.constant 1 : i32
    %33 = tpu.dynamic_rotate %1 by %c1_i32_8 dim 0 : vector<32x8xf32>, i32 -> vector<32x8xf32>
    %c-1_i32 = arith.constant -1 : i32
    %34 = vector.broadcast %c-1_i32 : i32 to vector<32x1xi32>
    %35 = arith.addi %18, %34 : vector<32x1xi32>
    %c0_i32_9 = arith.constant 0 : i32
    %36 = vector.broadcast %c0_i32_9 : i32 to vector<32x1xi32>
    %37 = arith.cmpi sge, %35, %36 : vector<32x1xi32>
    %c-1_i32_10 = arith.constant -1 : i32
    %38 = vector.broadcast %c-1_i32_10 : i32 to vector<32x1xi32>
    %39 = arith.addi %18, %38 : vector<32x1xi32>
    %c16_i32_11 = arith.constant 16 : i32
    %40 = vector.broadcast %c16_i32_11 : i32 to vector<32x1xi32>
    %41 = arith.cmpi slt, %39, %40 : vector<32x1xi32>
    %42 = arith.andi %37, %41 : vector<32x1xi1>
    %cst_12 = arith.constant 0.000000e+00 : f32
    %43 = vector.shape_cast %42 : vector<32x1xi1> to vector<32x1xi1>
    %44 = vector.broadcast %43 : vector<32x1xi1> to vector<32x8xi1>
    %45 = vector.broadcast %cst_12 : f32 to vector<32x8xf32>
    %46 = arith.select %44, %33, %45 : vector<32x8xi1>, vector<32x8xf32>
    %c31_i32 = arith.constant 31 : i32
    %47 = tpu.dynamic_rotate %1 by %c31_i32 dim 0 : vector<32x8xf32>, i32 -> vector<32x8xf32>
    %c1_i32_13 = arith.constant 1 : i32
    %48 = vector.broadcast %c1_i32_13 : i32 to vector<32x1xi32>
    %49 = arith.addi %18, %48 : vector<32x1xi32>
    %c0_i32_14 = arith.constant 0 : i32
    %50 = vector.broadcast %c0_i32_14 : i32 to vector<32x1xi32>
    %51 = arith.cmpi sge, %49, %50 : vector<32x1xi32>
    %c1_i32_15 = arith.constant 1 : i32
    %52 = vector.broadcast %c1_i32_15 : i32 to vector<32x1xi32>
    %53 = arith.addi %18, %52 : vector<32x1xi32>
    %c16_i32_16 = arith.constant 16 : i32
    %54 = vector.broadcast %c16_i32_16 : i32 to vector<32x1xi32>
    %55 = arith.cmpi slt, %53, %54 : vector<32x1xi32>
    %56 = arith.andi %51, %55 : vector<32x1xi1>
    %cst_17 = arith.constant 0.000000e+00 : f32
    %57 = vector.shape_cast %56 : vector<32x1xi1> to vector<32x1xi1>
    %58 = vector.broadcast %57 : vector<32x1xi1> to vector<32x8xi1>
    %59 = vector.broadcast %cst_17 : f32 to vector<32x8xf32>
    %60 = arith.select %58, %47, %59 : vector<32x8xi1>, vector<32x8xf32>
    %c30_i32 = arith.constant 30 : i32
    %61 = tpu.dynamic_rotate %1 by %c30_i32 dim 0 : vector<32x8xf32>, i32 -> vector<32x8xf32>
    %c2_i32_18 = arith.constant 2 : i32
    %62 = vector.broadcast %c2_i32_18 : i32 to vector<32x1xi32>
    %63 = arith.addi %18, %62 : vector<32x1xi32>
    %c0_i32_19 = arith.constant 0 : i32
    %64 = vector.broadcast %c0_i32_19 : i32 to vector<32x1xi32>
    %65 = arith.cmpi sge, %63, %64 : vector<32x1xi32>
    %c2_i32_20 = arith.constant 2 : i32
    %66 = vector.broadcast %c2_i32_20 : i32 to vector<32x1xi32>
    %67 = arith.addi %18, %66 : vector<32x1xi32>
    %c16_i32_21 = arith.constant 16 : i32
    %68 = vector.broadcast %c16_i32_21 : i32 to vector<32x1xi32>
    %69 = arith.cmpi slt, %67, %68 : vector<32x1xi32>
    %70 = arith.andi %65, %69 : vector<32x1xi1>
    %cst_22 = arith.constant 0.000000e+00 : f32
    %71 = vector.shape_cast %70 : vector<32x1xi1> to vector<32x1xi1>
    %72 = vector.broadcast %71 : vector<32x1xi1> to vector<32x8xi1>
    %73 = vector.broadcast %cst_22 : f32 to vector<32x8xf32>
    %74 = arith.select %72, %61, %73 : vector<32x8xi1>, vector<32x8xf32>
    %75 = tpu.concatenate %32, %46, %1, %60, %74 in 1 : vector<32x8xf32>, vector<32x8xf32>, vector<32x8xf32>, vector<32x8xf32>, vector<32x8xf32> -> vector<32x40xf32>
    %76 = arith.truncf %75 : vector<32x40xf32> to vector<32x40xbf16>
    %c0_23 = arith.constant 0 : index
    %c0_24 = arith.constant 0 : index
    %77 = vector.load %arg1[%c0_23, %c0_24] : memref<40x12xbf16, #tpu.memory_space<vmem>>, vector<40x12xbf16>
    %cst_25 = arith.constant dense<0.000000e+00> : vector<32x12xf32>
    %78 = tpu.matmul %76, %77, %cst_25 {dimension_numbers = #tpu.dot_dimension_numbers<[1], [0], [0], [1], [0, 0, 1, 1], [], []>} : vector<32x40xbf16>, vector<40x12xbf16>, vector<32x12xf32> -> vector<32x12xf32>
    %cst_26 = arith.constant dense<0.000000e+00> : vector<12xf32>
    %79 = vector.multi_reduction <add>, %78, %cst_26 [0] : vector<32x12xf32> to vector<12xf32>
    %80 = vector.shape_cast %79 : vector<12xf32> to vector<1x12xf32>
    %cst_27 = arith.constant 3.200000e+01 : f32
    %81 = vector.broadcast %cst_27 : f32 to vector<1x12xf32>
    %82 = arith.divf %80, %81 : vector<1x12xf32>
    %83 = vector.broadcast %82 : vector<1x12xf32> to vector<32x12xf32>
    %84 = arith.subf %78, %83 : vector<32x12xf32>
    %85 = arith.mulf %84, %84 : vector<32x12xf32>
    %cst_28 = arith.constant dense<0.000000e+00> : vector<12xf32>
    %86 = vector.multi_reduction <add>, %85, %cst_28 [0] : vector<32x12xf32> to vector<12xf32>
    %87 = vector.shape_cast %86 : vector<12xf32> to vector<1x12xf32>
    %cst_29 = arith.constant 3.200000e+01 : f32
    %88 = vector.broadcast %cst_29 : f32 to vector<1x12xf32>
    %89 = arith.divf %87, %88 : vector<1x12xf32>
    %cst_30 = arith.constant 9.99999974E-6 : f32
    %90 = vector.broadcast %cst_30 : f32 to vector<1x12xf32>
    %91 = arith.addf %89, %90 : vector<1x12xf32>
    %92 = math.rsqrt %91 : vector<1x12xf32>
    %93 = vector.broadcast %92 : vector<1x12xf32> to vector<32x12xf32>
    %94 = arith.mulf %84, %93 : vector<32x12xf32>
    %cst_31 = arith.constant 0.000000e+00 : f32
    %95 = vector.broadcast %cst_31 : f32 to vector<32x12xf32>
    %96 = arith.maximumf %94, %95 : vector<32x12xf32>
    %c2_i32_32 = arith.constant 2 : i32
    %97 = tpu.dynamic_rotate %96 by %c2_i32_32 dim 0 : vector<32x12xf32>, i32 -> vector<32x12xf32>
    %c-2_i32_33 = arith.constant -2 : i32
    %98 = vector.broadcast %c-2_i32_33 : i32 to vector<32x1xi32>
    %99 = arith.addi %18, %98 : vector<32x1xi32>
    %c0_i32_34 = arith.constant 0 : i32
    %100 = vector.broadcast %c0_i32_34 : i32 to vector<32x1xi32>
    %101 = arith.cmpi sge, %99, %100 : vector<32x1xi32>
    %c-2_i32_35 = arith.constant -2 : i32
    %102 = vector.broadcast %c-2_i32_35 : i32 to vector<32x1xi32>
    %103 = arith.addi %18, %102 : vector<32x1xi32>
    %c16_i32_36 = arith.constant 16 : i32
    %104 = vector.broadcast %c16_i32_36 : i32 to vector<32x1xi32>
    %105 = arith.cmpi slt, %103, %104 : vector<32x1xi32>
    %106 = arith.andi %101, %105 : vector<32x1xi1>
    %cst_37 = arith.constant 0.000000e+00 : f32
    %107 = vector.shape_cast %106 : vector<32x1xi1> to vector<32x1xi1>
    %108 = vector.broadcast %107 : vector<32x1xi1> to vector<32x12xi1>
    %109 = vector.broadcast %cst_37 : f32 to vector<32x12xf32>
    %110 = arith.select %108, %97, %109 : vector<32x12xi1>, vector<32x12xf32>
    %c1_i32_38 = arith.constant 1 : i32
    %111 = tpu.dynamic_rotate %96 by %c1_i32_38 dim 0 : vector<32x12xf32>, i32 -> vector<32x12xf32>
    %c-1_i32_39 = arith.constant -1 : i32
    %112 = vector.broadcast %c-1_i32_39 : i32 to vector<32x1xi32>
    %113 = arith.addi %18, %112 : vector<32x1xi32>
    %c0_i32_40 = arith.constant 0 : i32
    %114 = vector.broadcast %c0_i32_40 : i32 to vector<32x1xi32>
    %115 = arith.cmpi sge, %113, %114 : vector<32x1xi32>
    %c-1_i32_41 = arith.constant -1 : i32
    %116 = vector.broadcast %c-1_i32_41 : i32 to vector<32x1xi32>
    %117 = arith.addi %18, %116 : vector<32x1xi32>
    %c16_i32_42 = arith.constant 16 : i32
    %118 = vector.broadcast %c16_i32_42 : i32 to vector<32x1xi32>
    %119 = arith.cmpi slt, %117, %118 : vector<32x1xi32>
    %120 = arith.andi %115, %119 : vector<32x1xi1>
    %cst_43 = arith.constant 0.000000e+00 : f32
    %121 = vector.shape_cast %120 : vector<32x1xi1> to vector<32x1xi1>
    %122 = vector.broadcast %121 : vector<32x1xi1> to vector<32x12xi1>
    %123 = vector.broadcast %cst_43 : f32 to vector<32x12xf32>
    %124 = arith.select %122, %111, %123 : vector<32x12xi1>, vector<32x12xf32>
    %c31_i32_44 = arith.constant 31 : i32
    %125 = tpu.dynamic_rotate %96 by %c31_i32_44 dim 0 : vector<32x12xf32>, i32 -> vector<32x12xf32>
    %c1_i32_45 = arith.constant 1 : i32
    %126 = vector.broadcast %c1_i32_45 : i32 to vector<32x1xi32>
    %127 = arith.addi %18, %126 : vector<32x1xi32>
    %c0_i32_46 = arith.constant 0 : i32
    %128 = vector.broadcast %c0_i32_46 : i32 to vector<32x1xi32>
    %129 = arith.cmpi sge, %127, %128 : vector<32x1xi32>
    %c1_i32_47 = arith.constant 1 : i32
    %130 = vector.broadcast %c1_i32_47 : i32 to vector<32x1xi32>
    %131 = arith.addi %18, %130 : vector<32x1xi32>
    %c16_i32_48 = arith.constant 16 : i32
    %132 = vector.broadcast %c16_i32_48 : i32 to vector<32x1xi32>
    %133 = arith.cmpi slt, %131, %132 : vector<32x1xi32>
    %134 = arith.andi %129, %133 : vector<32x1xi1>
    %cst_49 = arith.constant 0.000000e+00 : f32
    %135 = vector.shape_cast %134 : vector<32x1xi1> to vector<32x1xi1>
    %136 = vector.broadcast %135 : vector<32x1xi1> to vector<32x12xi1>
    %137 = vector.broadcast %cst_49 : f32 to vector<32x12xf32>
    %138 = arith.select %136, %125, %137 : vector<32x12xi1>, vector<32x12xf32>
    %c30_i32_50 = arith.constant 30 : i32
    %139 = tpu.dynamic_rotate %96 by %c30_i32_50 dim 0 : vector<32x12xf32>, i32 -> vector<32x12xf32>
    %c2_i32_51 = arith.constant 2 : i32
    %140 = vector.broadcast %c2_i32_51 : i32 to vector<32x1xi32>
    %141 = arith.addi %18, %140 : vector<32x1xi32>
    %c0_i32_52 = arith.constant 0 : i32
    %142 = vector.broadcast %c0_i32_52 : i32 to vector<32x1xi32>
    %143 = arith.cmpi sge, %141, %142 : vector<32x1xi32>
    %c2_i32_53 = arith.constant 2 : i32
    %144 = vector.broadcast %c2_i32_53 : i32 to vector<32x1xi32>
    %145 = arith.addi %18, %144 : vector<32x1xi32>
    %c16_i32_54 = arith.constant 16 : i32
    %146 = vector.broadcast %c16_i32_54 : i32 to vector<32x1xi32>
    %147 = arith.cmpi slt, %145, %146 : vector<32x1xi32>
    %148 = arith.andi %143, %147 : vector<32x1xi1>
    %cst_55 = arith.constant 0.000000e+00 : f32
    %149 = vector.shape_cast %148 : vector<32x1xi1> to vector<32x1xi1>
    %150 = vector.broadcast %149 : vector<32x1xi1> to vector<32x12xi1>
    %151 = vector.broadcast %cst_55 : f32 to vector<32x12xf32>
    %152 = arith.select %150, %139, %151 : vector<32x12xi1>, vector<32x12xf32>
    %153 = tpu.concatenate %110, %124, %96, %138, %152 in 1 : vector<32x12xf32>, vector<32x12xf32>, vector<32x12xf32>, vector<32x12xf32>, vector<32x12xf32> -> vector<32x60xf32>
    %154 = arith.truncf %153 : vector<32x60xf32> to vector<32x60xbf16>
    %c0_56 = arith.constant 0 : index
    %c0_57 = arith.constant 0 : index
    %155 = vector.load %arg2[%c0_56, %c0_57] : memref<60x12xbf16, #tpu.memory_space<vmem>>, vector<60x12xbf16>
    %cst_58 = arith.constant dense<0.000000e+00> : vector<32x12xf32>
    %156 = tpu.matmul %154, %155, %cst_58 {dimension_numbers = #tpu.dot_dimension_numbers<[1], [0], [0], [1], [0, 0, 1, 1], [], []>} : vector<32x60xbf16>, vector<60x12xbf16>, vector<32x12xf32> -> vector<32x12xf32>
    %cst_59 = arith.constant dense<0.000000e+00> : vector<12xf32>
    %157 = vector.multi_reduction <add>, %156, %cst_59 [0] : vector<32x12xf32> to vector<12xf32>
    %158 = vector.shape_cast %157 : vector<12xf32> to vector<1x12xf32>
    %cst_60 = arith.constant 3.200000e+01 : f32
    %159 = vector.broadcast %cst_60 : f32 to vector<1x12xf32>
    %160 = arith.divf %158, %159 : vector<1x12xf32>
    %161 = vector.broadcast %160 : vector<1x12xf32> to vector<32x12xf32>
    %162 = arith.subf %156, %161 : vector<32x12xf32>
    %163 = arith.mulf %162, %162 : vector<32x12xf32>
    %cst_61 = arith.constant dense<0.000000e+00> : vector<12xf32>
    %164 = vector.multi_reduction <add>, %163, %cst_61 [0] : vector<32x12xf32> to vector<12xf32>
    %165 = vector.shape_cast %164 : vector<12xf32> to vector<1x12xf32>
    %cst_62 = arith.constant 3.200000e+01 : f32
    %166 = vector.broadcast %cst_62 : f32 to vector<1x12xf32>
    %167 = arith.divf %165, %166 : vector<1x12xf32>
    %cst_63 = arith.constant 9.99999974E-6 : f32
    %168 = vector.broadcast %cst_63 : f32 to vector<1x12xf32>
    %169 = arith.addf %167, %168 : vector<1x12xf32>
    %170 = math.rsqrt %169 : vector<1x12xf32>
    %171 = vector.broadcast %170 : vector<1x12xf32> to vector<32x12xf32>
    %172 = arith.mulf %162, %171 : vector<32x12xf32>
    %cst_64 = arith.constant 0.000000e+00 : f32
    %173 = vector.broadcast %cst_64 : f32 to vector<32x12xf32>
    %174 = arith.maximumf %172, %173 : vector<32x12xf32>
    %c1_i32_65 = arith.constant 1 : i32
    %175 = tpu.dynamic_rotate %174 by %c1_i32_65 dim 0 : vector<32x12xf32>, i32 -> vector<32x12xf32>
    %c-1_i32_66 = arith.constant -1 : i32
    %176 = vector.broadcast %c-1_i32_66 : i32 to vector<32x1xi32>
    %177 = arith.addi %18, %176 : vector<32x1xi32>
    %c0_i32_67 = arith.constant 0 : i32
    %178 = vector.broadcast %c0_i32_67 : i32 to vector<32x1xi32>
    %179 = arith.cmpi sge, %177, %178 : vector<32x1xi32>
    %c-1_i32_68 = arith.constant -1 : i32
    %180 = vector.broadcast %c-1_i32_68 : i32 to vector<32x1xi32>
    %181 = arith.addi %18, %180 : vector<32x1xi32>
    %c16_i32_69 = arith.constant 16 : i32
    %182 = vector.broadcast %c16_i32_69 : i32 to vector<32x1xi32>
    %183 = arith.cmpi slt, %181, %182 : vector<32x1xi32>
    %184 = arith.andi %179, %183 : vector<32x1xi1>
    %cst_70 = arith.constant 0.000000e+00 : f32
    %185 = vector.shape_cast %184 : vector<32x1xi1> to vector<32x1xi1>
    %186 = vector.broadcast %185 : vector<32x1xi1> to vector<32x12xi1>
    %187 = vector.broadcast %cst_70 : f32 to vector<32x12xf32>
    %188 = arith.select %186, %175, %187 : vector<32x12xi1>, vector<32x12xf32>
    %c31_i32_71 = arith.constant 31 : i32
    %189 = tpu.dynamic_rotate %174 by %c31_i32_71 dim 0 : vector<32x12xf32>, i32 -> vector<32x12xf32>
    %c1_i32_72 = arith.constant 1 : i32
    %190 = vector.broadcast %c1_i32_72 : i32 to vector<32x1xi32>
    %191 = arith.addi %18, %190 : vector<32x1xi32>
    %c0_i32_73 = arith.constant 0 : i32
    %192 = vector.broadcast %c0_i32_73 : i32 to vector<32x1xi32>
    %193 = arith.cmpi sge, %191, %192 : vector<32x1xi32>
    %c1_i32_74 = arith.constant 1 : i32
    %194 = vector.broadcast %c1_i32_74 : i32 to vector<32x1xi32>
    %195 = arith.addi %18, %194 : vector<32x1xi32>
    %c16_i32_75 = arith.constant 16 : i32
    %196 = vector.broadcast %c16_i32_75 : i32 to vector<32x1xi32>
    %197 = arith.cmpi slt, %195, %196 : vector<32x1xi32>
    %198 = arith.andi %193, %197 : vector<32x1xi1>
    %cst_76 = arith.constant 0.000000e+00 : f32
    %199 = vector.shape_cast %198 : vector<32x1xi1> to vector<32x1xi1>
    %200 = vector.broadcast %199 : vector<32x1xi1> to vector<32x12xi1>
    %201 = vector.broadcast %cst_76 : f32 to vector<32x12xf32>
    %202 = arith.select %200, %189, %201 : vector<32x12xi1>, vector<32x12xf32>
    %203 = tpu.concatenate %188, %174, %202 in 1 : vector<32x12xf32>, vector<32x12xf32>, vector<32x12xf32> -> vector<32x36xf32>
    %204 = arith.truncf %203 : vector<32x36xf32> to vector<32x36xbf16>
    %c0_77 = arith.constant 0 : index
    %c0_78 = arith.constant 0 : index
    %205 = vector.load %arg3[%c0_77, %c0_78] : memref<36x8xbf16, #tpu.memory_space<vmem>>, vector<36x8xbf16>
    %cst_79 = arith.constant dense<0.000000e+00> : vector<32x8xf32>
    %206 = tpu.matmul %204, %205, %cst_79 {dimension_numbers = #tpu.dot_dimension_numbers<[1], [0], [0], [1], [0, 0, 1, 1], [], []>} : vector<32x36xbf16>, vector<36x8xbf16>, vector<32x8xf32> -> vector<32x8xf32>
    %cst_80 = arith.constant dense<0.000000e+00> : vector<8xf32>
    %207 = vector.multi_reduction <add>, %206, %cst_80 [0] : vector<32x8xf32> to vector<8xf32>
    %208 = vector.shape_cast %207 : vector<8xf32> to vector<1x8xf32>
    %cst_81 = arith.constant 3.200000e+01 : f32
    %209 = vector.broadcast %cst_81 : f32 to vector<1x8xf32>
    %210 = arith.divf %208, %209 : vector<1x8xf32>
    %211 = vector.broadcast %210 : vector<1x8xf32> to vector<32x8xf32>
    %212 = arith.subf %206, %211 : vector<32x8xf32>
    %213 = arith.mulf %212, %212 : vector<32x8xf32>
    %cst_82 = arith.constant dense<0.000000e+00> : vector<8xf32>
    %214 = vector.multi_reduction <add>, %213, %cst_82 [0] : vector<32x8xf32> to vector<8xf32>
    %215 = vector.shape_cast %214 : vector<8xf32> to vector<1x8xf32>
    %cst_83 = arith.constant 3.200000e+01 : f32
    %216 = vector.broadcast %cst_83 : f32 to vector<1x8xf32>
    %217 = arith.divf %215, %216 : vector<1x8xf32>
    %cst_84 = arith.constant 9.99999974E-6 : f32
    %218 = vector.broadcast %cst_84 : f32 to vector<1x8xf32>
    %219 = arith.addf %217, %218 : vector<1x8xf32>
    %220 = math.rsqrt %219 : vector<1x8xf32>
    %221 = vector.broadcast %220 : vector<1x8xf32> to vector<32x8xf32>
    %222 = arith.mulf %212, %221 : vector<32x8xf32>
    %223 = arith.truncf %1 : vector<32x8xf32> to vector<32x8xbf16>
    %c0_85 = arith.constant 0 : index
    %c0_86 = arith.constant 0 : index
    %224 = vector.load %arg4[%c0_85, %c0_86] : memref<8x8xbf16, #tpu.memory_space<vmem>>, vector<8x8xbf16>
    %cst_87 = arith.constant dense<0.000000e+00> : vector<32x8xf32>
    %225 = tpu.matmul %223, %224, %cst_87 {dimension_numbers = #tpu.dot_dimension_numbers<[1], [0], [0], [1], [0, 0, 1, 1], [], []>} : vector<32x8xbf16>, vector<8x8xbf16>, vector<32x8xf32> -> vector<32x8xf32>
    %cst_88 = arith.constant dense<0.000000e+00> : vector<8xf32>
    %226 = vector.multi_reduction <add>, %225, %cst_88 [0] : vector<32x8xf32> to vector<8xf32>
    %227 = vector.shape_cast %226 : vector<8xf32> to vector<1x8xf32>
    %cst_89 = arith.constant 3.200000e+01 : f32
    %228 = vector.broadcast %cst_89 : f32 to vector<1x8xf32>
    %229 = arith.divf %227, %228 : vector<1x8xf32>
    %230 = vector.broadcast %229 : vector<1x8xf32> to vector<32x8xf32>
    %231 = arith.subf %225, %230 : vector<32x8xf32>
    %232 = arith.mulf %231, %231 : vector<32x8xf32>
    %cst_90 = arith.constant dense<0.000000e+00> : vector<8xf32>
    %233 = vector.multi_reduction <add>, %232, %cst_90 [0] : vector<32x8xf32> to vector<8xf32>
    %234 = vector.shape_cast %233 : vector<8xf32> to vector<1x8xf32>
    %cst_91 = arith.constant 3.200000e+01 : f32
    %235 = vector.broadcast %cst_91 : f32 to vector<1x8xf32>
    %236 = arith.divf %234, %235 : vector<1x8xf32>
    %cst_92 = arith.constant 9.99999974E-6 : f32
    %237 = vector.broadcast %cst_92 : f32 to vector<1x8xf32>
    %238 = arith.addf %236, %237 : vector<1x8xf32>
    %239 = math.rsqrt %238 : vector<1x8xf32>
    %240 = vector.broadcast %239 : vector<1x8xf32> to vector<32x8xf32>
    %241 = arith.mulf %231, %240 : vector<32x8xf32>
    %242 = arith.addf %222, %241 : vector<32x8xf32>
    %cst_93 = arith.constant 0.000000e+00 : f32
    %243 = vector.broadcast %cst_93 : f32 to vector<32x8xf32>
    %244 = arith.maximumf %242, %243 : vector<32x8xf32>
    %245 = vector.shape_cast %244 : vector<32x8xf32> to vector<2x16x8xf32>
    %c0_94 = arith.constant 0 : index
    %c0_95 = arith.constant 0 : index
    %c0_96 = arith.constant 0 : index
    %246 = vector.load %arg5[%c0_94, %c0_95, %c0_96] : memref<2x16x8xf32, #tpu.memory_space<vmem>>, vector<2x16x8xf32>
    tpu.vector_store %arg5[%c0_94, %c0_95, %c0_96], %245 {strides = array<i32>} : memref<2x16x8xf32, #tpu.memory_space<vmem>>, vector<2x16x8xf32>,
    return
  }
}

module attributes {stable_mosaic.version = 11 : i64} {
  func.func @_res_os_kernel(%arg0: memref<2x16x1xf32, #tpu.memory_space<vmem>>, %arg1: memref<5x12xf32, #tpu.memory_space<vmem>>, %arg2: memref<60x12xbf16, #tpu.memory_space<vmem>>, %arg3: memref<36x8xbf16, #tpu.memory_space<vmem>>, %arg4: memref<1x8xf32, #tpu.memory_space<vmem>>, %arg5: memref<2x16x8xf32, #tpu.memory_space<vmem>>) attributes {dimension_semantics = [], scalar_prefetch = 0 : i64, scratch_operands = 0 : i64, tpu.core_type = #tpu.core_type<tc>} {
    %c0 = arith.constant 0 : index
    %c0_0 = arith.constant 0 : index
    %c0_1 = arith.constant 0 : index
    %0 = vector.load %arg0[%c0, %c0_0, %c0_1] : memref<2x16x1xf32, #tpu.memory_space<vmem>>, vector<2x16x1xf32>
    %1 = vector.shape_cast %0 : vector<2x16x1xf32> to vector<32x1xf32>
    %2 = tpu.iota {dimensions = array<i32: 0>} : vector<32x1xi32>
    %c16_i32 = arith.constant 16 : i32
    %c0_i32 = arith.constant 0 : i32
    %3 = arith.cmpi eq, %c16_i32, %c0_i32 : i32
    %c1_i32 = arith.constant 1 : i32
    %4 = arith.select %3, %c1_i32, %c16_i32 : i32
    %5 = vector.broadcast %4 : i32 to vector<32x1xi32>
    %6 = arith.remsi %2, %5 : vector<32x1xi32>
    %c0_i32_2 = arith.constant 0 : i32
    %7 = vector.broadcast %c0_i32_2 : i32 to vector<32x1xi32>
    %8 = arith.cmpi ne, %6, %7 : vector<32x1xi32>
    %c0_i32_3 = arith.constant 0 : i32
    %9 = vector.broadcast %c0_i32_3 : i32 to vector<32x1xi32>
    %10 = arith.cmpi slt, %6, %9 : vector<32x1xi32>
    %c0_i32_4 = arith.constant 0 : i32
    %11 = arith.cmpi slt, %4, %c0_i32_4 : i32
    %12 = vector.broadcast %11 : i1 to vector<32x1xi1>
    %13 = vector.broadcast %12 : vector<32x1xi1> to vector<32x1xi1>
    %14 = arith.xori %10, %13 : vector<32x1xi1>
    %15 = arith.andi %14, %8 : vector<32x1xi1>
    %16 = vector.broadcast %4 : i32 to vector<32x1xi32>
    %17 = arith.addi %6, %16 : vector<32x1xi32>
    %18 = arith.select %15, %17, %6 : vector<32x1xi1>, vector<32x1xi32>
    %c2_i32 = arith.constant 2 : i32
    %19 = tpu.dynamic_rotate %1 by %c2_i32 dim 0 : vector<32x1xf32>, i32 -> vector<32x1xf32>
    %c-2_i32 = arith.constant -2 : i32
    %20 = vector.broadcast %c-2_i32 : i32 to vector<32x1xi32>
    %21 = arith.addi %18, %20 : vector<32x1xi32>
    %c0_i32_5 = arith.constant 0 : i32
    %22 = vector.broadcast %c0_i32_5 : i32 to vector<32x1xi32>
    %23 = arith.cmpi sge, %21, %22 : vector<32x1xi32>
    %c-2_i32_6 = arith.constant -2 : i32
    %24 = vector.broadcast %c-2_i32_6 : i32 to vector<32x1xi32>
    %25 = arith.addi %18, %24 : vector<32x1xi32>
    %c16_i32_7 = arith.constant 16 : i32
    %26 = vector.broadcast %c16_i32_7 : i32 to vector<32x1xi32>
    %27 = arith.cmpi slt, %25, %26 : vector<32x1xi32>
    %28 = arith.andi %23, %27 : vector<32x1xi1>
    %cst = arith.constant 0.000000e+00 : f32
    %29 = vector.broadcast %cst : f32 to vector<32x1xf32>
    %30 = arith.select %28, %19, %29 : vector<32x1xi1>, vector<32x1xf32>
    %c1_i32_8 = arith.constant 1 : i32
    %31 = tpu.dynamic_rotate %1 by %c1_i32_8 dim 0 : vector<32x1xf32>, i32 -> vector<32x1xf32>
    %c-1_i32 = arith.constant -1 : i32
    %32 = vector.broadcast %c-1_i32 : i32 to vector<32x1xi32>
    %33 = arith.addi %18, %32 : vector<32x1xi32>
    %c0_i32_9 = arith.constant 0 : i32
    %34 = vector.broadcast %c0_i32_9 : i32 to vector<32x1xi32>
    %35 = arith.cmpi sge, %33, %34 : vector<32x1xi32>
    %c-1_i32_10 = arith.constant -1 : i32
    %36 = vector.broadcast %c-1_i32_10 : i32 to vector<32x1xi32>
    %37 = arith.addi %18, %36 : vector<32x1xi32>
    %c16_i32_11 = arith.constant 16 : i32
    %38 = vector.broadcast %c16_i32_11 : i32 to vector<32x1xi32>
    %39 = arith.cmpi slt, %37, %38 : vector<32x1xi32>
    %40 = arith.andi %35, %39 : vector<32x1xi1>
    %cst_12 = arith.constant 0.000000e+00 : f32
    %41 = vector.broadcast %cst_12 : f32 to vector<32x1xf32>
    %42 = arith.select %40, %31, %41 : vector<32x1xi1>, vector<32x1xf32>
    %c31_i32 = arith.constant 31 : i32
    %43 = tpu.dynamic_rotate %1 by %c31_i32 dim 0 : vector<32x1xf32>, i32 -> vector<32x1xf32>
    %c1_i32_13 = arith.constant 1 : i32
    %44 = vector.broadcast %c1_i32_13 : i32 to vector<32x1xi32>
    %45 = arith.addi %18, %44 : vector<32x1xi32>
    %c0_i32_14 = arith.constant 0 : i32
    %46 = vector.broadcast %c0_i32_14 : i32 to vector<32x1xi32>
    %47 = arith.cmpi sge, %45, %46 : vector<32x1xi32>
    %c1_i32_15 = arith.constant 1 : i32
    %48 = vector.broadcast %c1_i32_15 : i32 to vector<32x1xi32>
    %49 = arith.addi %18, %48 : vector<32x1xi32>
    %c16_i32_16 = arith.constant 16 : i32
    %50 = vector.broadcast %c16_i32_16 : i32 to vector<32x1xi32>
    %51 = arith.cmpi slt, %49, %50 : vector<32x1xi32>
    %52 = arith.andi %47, %51 : vector<32x1xi1>
    %cst_17 = arith.constant 0.000000e+00 : f32
    %53 = vector.broadcast %cst_17 : f32 to vector<32x1xf32>
    %54 = arith.select %52, %43, %53 : vector<32x1xi1>, vector<32x1xf32>
    %c30_i32 = arith.constant 30 : i32
    %55 = tpu.dynamic_rotate %1 by %c30_i32 dim 0 : vector<32x1xf32>, i32 -> vector<32x1xf32>
    %c2_i32_18 = arith.constant 2 : i32
    %56 = vector.broadcast %c2_i32_18 : i32 to vector<32x1xi32>
    %57 = arith.addi %18, %56 : vector<32x1xi32>
    %c0_i32_19 = arith.constant 0 : i32
    %58 = vector.broadcast %c0_i32_19 : i32 to vector<32x1xi32>
    %59 = arith.cmpi sge, %57, %58 : vector<32x1xi32>
    %c2_i32_20 = arith.constant 2 : i32
    %60 = vector.broadcast %c2_i32_20 : i32 to vector<32x1xi32>
    %61 = arith.addi %18, %60 : vector<32x1xi32>
    %c16_i32_21 = arith.constant 16 : i32
    %62 = vector.broadcast %c16_i32_21 : i32 to vector<32x1xi32>
    %63 = arith.cmpi slt, %61, %62 : vector<32x1xi32>
    %64 = arith.andi %59, %63 : vector<32x1xi1>
    %cst_22 = arith.constant 0.000000e+00 : f32
    %65 = vector.broadcast %cst_22 : f32 to vector<32x1xf32>
    %66 = arith.select %64, %55, %65 : vector<32x1xi1>, vector<32x1xf32>
    %c0_23 = arith.constant 0 : index
    %c0_24 = arith.constant 0 : index
    %67 = vector.load %arg1[%c0_23, %c0_24] : memref<5x12xf32, #tpu.memory_space<vmem>>, vector<5x12xf32>
    %cst_25 = arith.constant 0.000000e+00 : f32
    %68 = vector.broadcast %cst_25 : f32 to vector<32x12xf32>
    %69 = vector.extract_strided_slice %67 {offsets = [0, 0], sizes = [1, 12], strides = [1, 1]} : vector<5x12xf32> to vector<1x12xf32>
    %70 = vector.broadcast %30 : vector<32x1xf32> to vector<32x12xf32>
    %71 = vector.broadcast %69 : vector<1x12xf32> to vector<32x12xf32>
    %72 = arith.mulf %70, %71 : vector<32x12xf32>
    %73 = arith.addf %68, %72 : vector<32x12xf32>
    %74 = vector.extract_strided_slice %67 {offsets = [1, 0], sizes = [1, 12], strides = [1, 1]} : vector<5x12xf32> to vector<1x12xf32>
    %75 = vector.broadcast %42 : vector<32x1xf32> to vector<32x12xf32>
    %76 = vector.broadcast %74 : vector<1x12xf32> to vector<32x12xf32>
    %77 = arith.mulf %75, %76 : vector<32x12xf32>
    %78 = arith.addf %73, %77 : vector<32x12xf32>
    %79 = vector.extract_strided_slice %67 {offsets = [2, 0], sizes = [1, 12], strides = [1, 1]} : vector<5x12xf32> to vector<1x12xf32>
    %80 = vector.broadcast %1 : vector<32x1xf32> to vector<32x12xf32>
    %81 = vector.broadcast %79 : vector<1x12xf32> to vector<32x12xf32>
    %82 = arith.mulf %80, %81 : vector<32x12xf32>
    %83 = arith.addf %78, %82 : vector<32x12xf32>
    %84 = vector.extract_strided_slice %67 {offsets = [3, 0], sizes = [1, 12], strides = [1, 1]} : vector<5x12xf32> to vector<1x12xf32>
    %85 = vector.broadcast %54 : vector<32x1xf32> to vector<32x12xf32>
    %86 = vector.broadcast %84 : vector<1x12xf32> to vector<32x12xf32>
    %87 = arith.mulf %85, %86 : vector<32x12xf32>
    %88 = arith.addf %83, %87 : vector<32x12xf32>
    %89 = vector.extract_strided_slice %67 {offsets = [4, 0], sizes = [1, 12], strides = [1, 1]} : vector<5x12xf32> to vector<1x12xf32>
    %90 = vector.broadcast %66 : vector<32x1xf32> to vector<32x12xf32>
    %91 = vector.broadcast %89 : vector<1x12xf32> to vector<32x12xf32>
    %92 = arith.mulf %90, %91 : vector<32x12xf32>
    %93 = arith.addf %88, %92 : vector<32x12xf32>
    %cst_26 = arith.constant dense<0.000000e+00> : vector<12xf32>
    %94 = vector.multi_reduction <add>, %93, %cst_26 [0] : vector<32x12xf32> to vector<12xf32>
    %95 = vector.shape_cast %94 : vector<12xf32> to vector<1x12xf32>
    %cst_27 = arith.constant 3.200000e+01 : f32
    %96 = vector.broadcast %cst_27 : f32 to vector<1x12xf32>
    %97 = arith.divf %95, %96 : vector<1x12xf32>
    %98 = vector.broadcast %97 : vector<1x12xf32> to vector<32x12xf32>
    %99 = arith.subf %93, %98 : vector<32x12xf32>
    %100 = arith.mulf %99, %99 : vector<32x12xf32>
    %cst_28 = arith.constant dense<0.000000e+00> : vector<12xf32>
    %101 = vector.multi_reduction <add>, %100, %cst_28 [0] : vector<32x12xf32> to vector<12xf32>
    %102 = vector.shape_cast %101 : vector<12xf32> to vector<1x12xf32>
    %cst_29 = arith.constant 3.200000e+01 : f32
    %103 = vector.broadcast %cst_29 : f32 to vector<1x12xf32>
    %104 = arith.divf %102, %103 : vector<1x12xf32>
    %cst_30 = arith.constant 9.99999974E-6 : f32
    %105 = vector.broadcast %cst_30 : f32 to vector<1x12xf32>
    %106 = arith.addf %104, %105 : vector<1x12xf32>
    %107 = math.rsqrt %106 : vector<1x12xf32>
    %108 = vector.broadcast %107 : vector<1x12xf32> to vector<32x12xf32>
    %109 = arith.mulf %99, %108 : vector<32x12xf32>
    %cst_31 = arith.constant 0.000000e+00 : f32
    %110 = vector.broadcast %cst_31 : f32 to vector<32x12xf32>
    %111 = arith.maximumf %109, %110 : vector<32x12xf32>
    %c2_i32_32 = arith.constant 2 : i32
    %112 = tpu.dynamic_rotate %111 by %c2_i32_32 dim 0 : vector<32x12xf32>, i32 -> vector<32x12xf32>
    %c-2_i32_33 = arith.constant -2 : i32
    %113 = vector.broadcast %c-2_i32_33 : i32 to vector<32x1xi32>
    %114 = arith.addi %18, %113 : vector<32x1xi32>
    %c0_i32_34 = arith.constant 0 : i32
    %115 = vector.broadcast %c0_i32_34 : i32 to vector<32x1xi32>
    %116 = arith.cmpi sge, %114, %115 : vector<32x1xi32>
    %c-2_i32_35 = arith.constant -2 : i32
    %117 = vector.broadcast %c-2_i32_35 : i32 to vector<32x1xi32>
    %118 = arith.addi %18, %117 : vector<32x1xi32>
    %c16_i32_36 = arith.constant 16 : i32
    %119 = vector.broadcast %c16_i32_36 : i32 to vector<32x1xi32>
    %120 = arith.cmpi slt, %118, %119 : vector<32x1xi32>
    %121 = arith.andi %116, %120 : vector<32x1xi1>
    %cst_37 = arith.constant 0.000000e+00 : f32
    %122 = vector.shape_cast %121 : vector<32x1xi1> to vector<32x1xi1>
    %123 = vector.broadcast %122 : vector<32x1xi1> to vector<32x12xi1>
    %124 = vector.broadcast %cst_37 : f32 to vector<32x12xf32>
    %125 = arith.select %123, %112, %124 : vector<32x12xi1>, vector<32x12xf32>
    %c1_i32_38 = arith.constant 1 : i32
    %126 = tpu.dynamic_rotate %111 by %c1_i32_38 dim 0 : vector<32x12xf32>, i32 -> vector<32x12xf32>
    %c-1_i32_39 = arith.constant -1 : i32
    %127 = vector.broadcast %c-1_i32_39 : i32 to vector<32x1xi32>
    %128 = arith.addi %18, %127 : vector<32x1xi32>
    %c0_i32_40 = arith.constant 0 : i32
    %129 = vector.broadcast %c0_i32_40 : i32 to vector<32x1xi32>
    %130 = arith.cmpi sge, %128, %129 : vector<32x1xi32>
    %c-1_i32_41 = arith.constant -1 : i32
    %131 = vector.broadcast %c-1_i32_41 : i32 to vector<32x1xi32>
    %132 = arith.addi %18, %131 : vector<32x1xi32>
    %c16_i32_42 = arith.constant 16 : i32
    %133 = vector.broadcast %c16_i32_42 : i32 to vector<32x1xi32>
    %134 = arith.cmpi slt, %132, %133 : vector<32x1xi32>
    %135 = arith.andi %130, %134 : vector<32x1xi1>
    %cst_43 = arith.constant 0.000000e+00 : f32
    %136 = vector.shape_cast %135 : vector<32x1xi1> to vector<32x1xi1>
    %137 = vector.broadcast %136 : vector<32x1xi1> to vector<32x12xi1>
    %138 = vector.broadcast %cst_43 : f32 to vector<32x12xf32>
    %139 = arith.select %137, %126, %138 : vector<32x12xi1>, vector<32x12xf32>
    %c31_i32_44 = arith.constant 31 : i32
    %140 = tpu.dynamic_rotate %111 by %c31_i32_44 dim 0 : vector<32x12xf32>, i32 -> vector<32x12xf32>
    %c1_i32_45 = arith.constant 1 : i32
    %141 = vector.broadcast %c1_i32_45 : i32 to vector<32x1xi32>
    %142 = arith.addi %18, %141 : vector<32x1xi32>
    %c0_i32_46 = arith.constant 0 : i32
    %143 = vector.broadcast %c0_i32_46 : i32 to vector<32x1xi32>
    %144 = arith.cmpi sge, %142, %143 : vector<32x1xi32>
    %c1_i32_47 = arith.constant 1 : i32
    %145 = vector.broadcast %c1_i32_47 : i32 to vector<32x1xi32>
    %146 = arith.addi %18, %145 : vector<32x1xi32>
    %c16_i32_48 = arith.constant 16 : i32
    %147 = vector.broadcast %c16_i32_48 : i32 to vector<32x1xi32>
    %148 = arith.cmpi slt, %146, %147 : vector<32x1xi32>
    %149 = arith.andi %144, %148 : vector<32x1xi1>
    %cst_49 = arith.constant 0.000000e+00 : f32
    %150 = vector.shape_cast %149 : vector<32x1xi1> to vector<32x1xi1>
    %151 = vector.broadcast %150 : vector<32x1xi1> to vector<32x12xi1>
    %152 = vector.broadcast %cst_49 : f32 to vector<32x12xf32>
    %153 = arith.select %151, %140, %152 : vector<32x12xi1>, vector<32x12xf32>
    %c30_i32_50 = arith.constant 30 : i32
    %154 = tpu.dynamic_rotate %111 by %c30_i32_50 dim 0 : vector<32x12xf32>, i32 -> vector<32x12xf32>
    %c2_i32_51 = arith.constant 2 : i32
    %155 = vector.broadcast %c2_i32_51 : i32 to vector<32x1xi32>
    %156 = arith.addi %18, %155 : vector<32x1xi32>
    %c0_i32_52 = arith.constant 0 : i32
    %157 = vector.broadcast %c0_i32_52 : i32 to vector<32x1xi32>
    %158 = arith.cmpi sge, %156, %157 : vector<32x1xi32>
    %c2_i32_53 = arith.constant 2 : i32
    %159 = vector.broadcast %c2_i32_53 : i32 to vector<32x1xi32>
    %160 = arith.addi %18, %159 : vector<32x1xi32>
    %c16_i32_54 = arith.constant 16 : i32
    %161 = vector.broadcast %c16_i32_54 : i32 to vector<32x1xi32>
    %162 = arith.cmpi slt, %160, %161 : vector<32x1xi32>
    %163 = arith.andi %158, %162 : vector<32x1xi1>
    %cst_55 = arith.constant 0.000000e+00 : f32
    %164 = vector.shape_cast %163 : vector<32x1xi1> to vector<32x1xi1>
    %165 = vector.broadcast %164 : vector<32x1xi1> to vector<32x12xi1>
    %166 = vector.broadcast %cst_55 : f32 to vector<32x12xf32>
    %167 = arith.select %165, %154, %166 : vector<32x12xi1>, vector<32x12xf32>
    %168 = tpu.concatenate %125, %139, %111, %153, %167 in 1 : vector<32x12xf32>, vector<32x12xf32>, vector<32x12xf32>, vector<32x12xf32>, vector<32x12xf32> -> vector<32x60xf32>
    %169 = arith.truncf %168 : vector<32x60xf32> to vector<32x60xbf16>
    %c0_56 = arith.constant 0 : index
    %c0_57 = arith.constant 0 : index
    %170 = vector.load %arg2[%c0_56, %c0_57] : memref<60x12xbf16, #tpu.memory_space<vmem>>, vector<60x12xbf16>
    %cst_58 = arith.constant dense<0.000000e+00> : vector<32x12xf32>
    %171 = tpu.matmul %169, %170, %cst_58 {dimension_numbers = #tpu.dot_dimension_numbers<[1], [0], [0], [1], [0, 0, 1, 1], [], []>} : vector<32x60xbf16>, vector<60x12xbf16>, vector<32x12xf32> -> vector<32x12xf32>
    %cst_59 = arith.constant dense<0.000000e+00> : vector<12xf32>
    %172 = vector.multi_reduction <add>, %171, %cst_59 [0] : vector<32x12xf32> to vector<12xf32>
    %173 = vector.shape_cast %172 : vector<12xf32> to vector<1x12xf32>
    %cst_60 = arith.constant 3.200000e+01 : f32
    %174 = vector.broadcast %cst_60 : f32 to vector<1x12xf32>
    %175 = arith.divf %173, %174 : vector<1x12xf32>
    %176 = vector.broadcast %175 : vector<1x12xf32> to vector<32x12xf32>
    %177 = arith.subf %171, %176 : vector<32x12xf32>
    %178 = arith.mulf %177, %177 : vector<32x12xf32>
    %cst_61 = arith.constant dense<0.000000e+00> : vector<12xf32>
    %179 = vector.multi_reduction <add>, %178, %cst_61 [0] : vector<32x12xf32> to vector<12xf32>
    %180 = vector.shape_cast %179 : vector<12xf32> to vector<1x12xf32>
    %cst_62 = arith.constant 3.200000e+01 : f32
    %181 = vector.broadcast %cst_62 : f32 to vector<1x12xf32>
    %182 = arith.divf %180, %181 : vector<1x12xf32>
    %cst_63 = arith.constant 9.99999974E-6 : f32
    %183 = vector.broadcast %cst_63 : f32 to vector<1x12xf32>
    %184 = arith.addf %182, %183 : vector<1x12xf32>
    %185 = math.rsqrt %184 : vector<1x12xf32>
    %186 = vector.broadcast %185 : vector<1x12xf32> to vector<32x12xf32>
    %187 = arith.mulf %177, %186 : vector<32x12xf32>
    %cst_64 = arith.constant 0.000000e+00 : f32
    %188 = vector.broadcast %cst_64 : f32 to vector<32x12xf32>
    %189 = arith.maximumf %187, %188 : vector<32x12xf32>
    %c1_i32_65 = arith.constant 1 : i32
    %190 = tpu.dynamic_rotate %189 by %c1_i32_65 dim 0 : vector<32x12xf32>, i32 -> vector<32x12xf32>
    %c-1_i32_66 = arith.constant -1 : i32
    %191 = vector.broadcast %c-1_i32_66 : i32 to vector<32x1xi32>
    %192 = arith.addi %18, %191 : vector<32x1xi32>
    %c0_i32_67 = arith.constant 0 : i32
    %193 = vector.broadcast %c0_i32_67 : i32 to vector<32x1xi32>
    %194 = arith.cmpi sge, %192, %193 : vector<32x1xi32>
    %c-1_i32_68 = arith.constant -1 : i32
    %195 = vector.broadcast %c-1_i32_68 : i32 to vector<32x1xi32>
    %196 = arith.addi %18, %195 : vector<32x1xi32>
    %c16_i32_69 = arith.constant 16 : i32
    %197 = vector.broadcast %c16_i32_69 : i32 to vector<32x1xi32>
    %198 = arith.cmpi slt, %196, %197 : vector<32x1xi32>
    %199 = arith.andi %194, %198 : vector<32x1xi1>
    %cst_70 = arith.constant 0.000000e+00 : f32
    %200 = vector.shape_cast %199 : vector<32x1xi1> to vector<32x1xi1>
    %201 = vector.broadcast %200 : vector<32x1xi1> to vector<32x12xi1>
    %202 = vector.broadcast %cst_70 : f32 to vector<32x12xf32>
    %203 = arith.select %201, %190, %202 : vector<32x12xi1>, vector<32x12xf32>
    %c31_i32_71 = arith.constant 31 : i32
    %204 = tpu.dynamic_rotate %189 by %c31_i32_71 dim 0 : vector<32x12xf32>, i32 -> vector<32x12xf32>
    %c1_i32_72 = arith.constant 1 : i32
    %205 = vector.broadcast %c1_i32_72 : i32 to vector<32x1xi32>
    %206 = arith.addi %18, %205 : vector<32x1xi32>
    %c0_i32_73 = arith.constant 0 : i32
    %207 = vector.broadcast %c0_i32_73 : i32 to vector<32x1xi32>
    %208 = arith.cmpi sge, %206, %207 : vector<32x1xi32>
    %c1_i32_74 = arith.constant 1 : i32
    %209 = vector.broadcast %c1_i32_74 : i32 to vector<32x1xi32>
    %210 = arith.addi %18, %209 : vector<32x1xi32>
    %c16_i32_75 = arith.constant 16 : i32
    %211 = vector.broadcast %c16_i32_75 : i32 to vector<32x1xi32>
    %212 = arith.cmpi slt, %210, %211 : vector<32x1xi32>
    %213 = arith.andi %208, %212 : vector<32x1xi1>
    %cst_76 = arith.constant 0.000000e+00 : f32
    %214 = vector.shape_cast %213 : vector<32x1xi1> to vector<32x1xi1>
    %215 = vector.broadcast %214 : vector<32x1xi1> to vector<32x12xi1>
    %216 = vector.broadcast %cst_76 : f32 to vector<32x12xf32>
    %217 = arith.select %215, %204, %216 : vector<32x12xi1>, vector<32x12xf32>
    %218 = tpu.concatenate %203, %189, %217 in 1 : vector<32x12xf32>, vector<32x12xf32>, vector<32x12xf32> -> vector<32x36xf32>
    %219 = arith.truncf %218 : vector<32x36xf32> to vector<32x36xbf16>
    %c0_77 = arith.constant 0 : index
    %c0_78 = arith.constant 0 : index
    %220 = vector.load %arg3[%c0_77, %c0_78] : memref<36x8xbf16, #tpu.memory_space<vmem>>, vector<36x8xbf16>
    %cst_79 = arith.constant dense<0.000000e+00> : vector<32x8xf32>
    %221 = tpu.matmul %219, %220, %cst_79 {dimension_numbers = #tpu.dot_dimension_numbers<[1], [0], [0], [1], [0, 0, 1, 1], [], []>} : vector<32x36xbf16>, vector<36x8xbf16>, vector<32x8xf32> -> vector<32x8xf32>
    %cst_80 = arith.constant dense<0.000000e+00> : vector<8xf32>
    %222 = vector.multi_reduction <add>, %221, %cst_80 [0] : vector<32x8xf32> to vector<8xf32>
    %223 = vector.shape_cast %222 : vector<8xf32> to vector<1x8xf32>
    %cst_81 = arith.constant 3.200000e+01 : f32
    %224 = vector.broadcast %cst_81 : f32 to vector<1x8xf32>
    %225 = arith.divf %223, %224 : vector<1x8xf32>
    %226 = vector.broadcast %225 : vector<1x8xf32> to vector<32x8xf32>
    %227 = arith.subf %221, %226 : vector<32x8xf32>
    %228 = arith.mulf %227, %227 : vector<32x8xf32>
    %cst_82 = arith.constant dense<0.000000e+00> : vector<8xf32>
    %229 = vector.multi_reduction <add>, %228, %cst_82 [0] : vector<32x8xf32> to vector<8xf32>
    %230 = vector.shape_cast %229 : vector<8xf32> to vector<1x8xf32>
    %cst_83 = arith.constant 3.200000e+01 : f32
    %231 = vector.broadcast %cst_83 : f32 to vector<1x8xf32>
    %232 = arith.divf %230, %231 : vector<1x8xf32>
    %cst_84 = arith.constant 9.99999974E-6 : f32
    %233 = vector.broadcast %cst_84 : f32 to vector<1x8xf32>
    %234 = arith.addf %232, %233 : vector<1x8xf32>
    %235 = math.rsqrt %234 : vector<1x8xf32>
    %236 = vector.broadcast %235 : vector<1x8xf32> to vector<32x8xf32>
    %237 = arith.mulf %227, %236 : vector<32x8xf32>
    %c0_85 = arith.constant 0 : index
    %c0_86 = arith.constant 0 : index
    %238 = vector.load %arg4[%c0_85, %c0_86] : memref<1x8xf32, #tpu.memory_space<vmem>>, vector<1x8xf32>
    %239 = vector.broadcast %1 : vector<32x1xf32> to vector<32x8xf32>
    %240 = vector.broadcast %238 : vector<1x8xf32> to vector<32x8xf32>
    %241 = arith.mulf %239, %240 : vector<32x8xf32>
    %cst_87 = arith.constant dense<0.000000e+00> : vector<8xf32>
    %242 = vector.multi_reduction <add>, %241, %cst_87 [0] : vector<32x8xf32> to vector<8xf32>
    %243 = vector.shape_cast %242 : vector<8xf32> to vector<1x8xf32>
    %cst_88 = arith.constant 3.200000e+01 : f32
    %244 = vector.broadcast %cst_88 : f32 to vector<1x8xf32>
    %245 = arith.divf %243, %244 : vector<1x8xf32>
    %246 = vector.broadcast %245 : vector<1x8xf32> to vector<32x8xf32>
    %247 = arith.subf %241, %246 : vector<32x8xf32>
    %248 = arith.mulf %247, %247 : vector<32x8xf32>
    %cst_89 = arith.constant dense<0.000000e+00> : vector<8xf32>
    %249 = vector.multi_reduction <add>, %248, %cst_89 [0] : vector<32x8xf32> to vector<8xf32>
    %250 = vector.shape_cast %249 : vector<8xf32> to vector<1x8xf32>
    %cst_90 = arith.constant 3.200000e+01 : f32
    %251 = vector.broadcast %cst_90 : f32 to vector<1x8xf32>
    %252 = arith.divf %250, %251 : vector<1x8xf32>
    %cst_91 = arith.constant 9.99999974E-6 : f32
    %253 = vector.broadcast %cst_91 : f32 to vector<1x8xf32>
    %254 = arith.addf %252, %253 : vector<1x8xf32>
    %255 = math.rsqrt %254 : vector<1x8xf32>
    %256 = vector.broadcast %255 : vector<1x8xf32> to vector<32x8xf32>
    %257 = arith.mulf %247, %256 : vector<32x8xf32>
    %258 = arith.addf %237, %257 : vector<32x8xf32>
    %cst_92 = arith.constant 0.000000e+00 : f32
    %259 = vector.broadcast %cst_92 : f32 to vector<32x8xf32>
    %260 = arith.maximumf %258, %259 : vector<32x8xf32>
    %261 = vector.shape_cast %260 : vector<32x8xf32> to vector<2x16x8xf32>
    %c0_93 = arith.constant 0 : index
    %c0_94 = arith.constant 0 : index
    %c0_95 = arith.constant 0 : index
    %262 = vector.load %arg5[%c0_93, %c0_94, %c0_95] : memref<2x16x8xf32, #tpu.memory_space<vmem>>, vector<2x16x8xf32>
    tpu.vector_store %arg5[%c0_93, %c0_94, %c0_95], %261 {strides = array<i32>} : memref<2x16x8xf32, #tpu.memory_space<vmem>>, vector<2x16x8xf32>,
    return
  }
}

</mosaic_0001>

<llo_original>
// kernel: forward.3
$region0: #{forward.3}
  #allocation0 [shape = 'u32[]', space=smem, size = 0x4, offset = 0x4, fixed_abs, tag = 'smem constant byte address 0x4 - core index']
  #allocation1 [shape = 'u32[144,128]{1,0:T(1,128)}', space=vmem, size = 0x12000, scoped, tag = 'internal scratch']
  %s0 = inlined_call_operand.vmem [shape: f32[2,16,8], index: 0, kind: input, shape index: {}]
  %s1 = inlined_call_operand.vmem [shape: bf16[40,12], index: 1, kind: input, shape index: {}]
  %s2 = inlined_call_operand.vmem [shape: bf16[60,12], index: 2, kind: input, shape index: {}]
  %s3 = inlined_call_operand.vmem [shape: bf16[36,8], index: 3, kind: input, shape index: {}]
  %s4 = inlined_call_operand.vmem [shape: bf16[8,8], index: 4, kind: input, shape index: {}]
  %s5 = inlined_call_operand.vmem [shape: f32[2,16,8], index: 5, kind: output, shape index: {}]
  %s6 = sld [smem:[#allocation0]]
  $region30: #{forward.3} parent=0
    _
  %s8 = ssub.s32 1, %s6
  %s9 = scalar_select 0, %s8, %s6
  // Predicated region
  $region2: #{forward.3} parent=0 // pred_check
    _
  $region3: #{forward.3} parent=0 // pred_check_branch
    %11 = sbr.rel (0) target = $region5
  $region4: #{forward.3} parent=0 // pred_region
    _
  $region5: #{forward.3} parent=0 // pred_fallthru
    _
  // Predicated region
  $region6: #{forward.3} parent=0 // pred_check
    _
  $region7: #{forward.3} parent=0 // pred_check_branch
    %13 = sbr.rel (0) target = $region9
  $region8: #{forward.3} parent=0 // pred_region
    _
  $region9: #{forward.3} parent=0 // pred_fallthru
    _
  // Predicated region
  $region10: #{forward.3} parent=0 // pred_check
    _
  $region11: #{forward.3} parent=0 // pred_check_branch
    %15 = sbr.rel (0) target = $region13
  $region12: #{forward.3} parent=0 // pred_region
    _
  $region13: #{forward.3} parent=0 // pred_fallthru
    _
  // Predicated region
  $region14: #{forward.3} parent=0 // pred_check
    _
  $region15: #{forward.3} parent=0 // pred_check_branch
    %17 = sbr.rel (0) target = $region17
  $region16: #{forward.3} parent=0 // pred_region
    _
  $region17: #{forward.3} parent=0 // pred_fallthru
    _
  // Predicated region
  $region18: #{forward.3} parent=0 // pred_check
    _
  $region19: #{forward.3} parent=0 // pred_check_branch
    %19 = sbr.rel (0) target = $region21
  $region20: #{forward.3} parent=0 // pred_region
    _
  $region21: #{forward.3} parent=0 // pred_fallthru
    _
  %v21 = vld [vmem:[%s0] sm:$0xff]
  %v22 = vld [vmem:[%s0 + $0x8] sm:$0xff]
  %v23 = vld [vmem:[%s0 + $0x10] sm:$0xff]
  %v24 = vld [vmem:[%s0 + $0x18] sm:$0xff]
  %v25 = vlaneseq
  %v26 = vshrl.u32 %v25, 7
  %v27 = vadd.s32 %v26, 8
  %v28 = vadd.s32 %v26, 16
  %v29 = vadd.s32 %v26, 24
  %vm30 = vcmp.lt.s32.totalorder %v26, 0
  %v31 = vsub.s32 0, %v26
  %v32 = vsel %vm30, %v31, %v26
  %v33 = vshrl.u32 %v32, 4
  %v34 = vand.u32 %v32, 15
  %v35 = vsub.s32 0, %v34
  %v36 = vsel %vm30, %v35, %v34
  %vm37 = vcmp.lt.s32.totalorder %v27, 0
  %v38 = vsub.s32 0, %v27
  %v39 = vsel %vm37, %v38, %v27
  %v40 = vshrl.u32 %v39, 4
  %v41 = vand.u32 %v39, 15
  %v42 = vsub.s32 0, %v41
  %v43 = vsel %vm37, %v42, %v41
  %vm44 = vcmp.lt.s32.totalorder %v28, 0
  %v45 = vsub.s32 0, %v28
  %v46 = vsel %vm44, %v45, %v28
  %v47 = vshrl.u32 %v46, 4
  %v48 = vand.u32 %v46, 15
  %v49 = vsub.s32 0, %v48
  %v50 = vsel %vm44, %v49, %v48
  %vm51 = vcmp.lt.s32.totalorder %v29, 0
  %v52 = vsub.s32 0, %v29
  %v53 = vsel %vm51, %v52, %v29
  %v54 = vshrl.u32 %v53, 4
  %v55 = vand.u32 %v53, 15
  %v56 = vsub.s32 0, %v55
  %v57 = vsel %vm51, %v56, %v55
  %vm58 = vcmp.ne.s32.totalorder %v36, 0
  %vm59 = vcmp.ne.s32.totalorder %v43, 0
  %vm60 = vcmp.ne.s32.totalorder %v50, 0
  %vm61 = vcmp.ne.s32.totalorder %v57, 0
  %vm62 = vcmp.lt.s32.totalorder %v36, 0
  %vm63 = vcmp.lt.s32.totalorder %v43, 0
  %vm64 = vcmp.lt.s32.totalorder %v50, 0
  %vm65 = vcmp.lt.s32.totalorder %v57, 0
  %vm66 = vmand %vm62, %vm58
  %vm67 = vmand %vm63, %vm59
  %vm68 = vmand %vm64, %vm60
  %vm69 = vmand %vm65, %vm61
  %v70 = vadd.s32 %v36, 16
  %v71 = vadd.s32 %v43, 16
  %v72 = vadd.s32 %v50, 16
  %v73 = vadd.s32 %v57, 16
  %v74 = vsel %vm66, %v70, %v36
  %v75 = vsel %vm67, %v71, %v43
  %v76 = vsel %vm68, %v72, %v50
  %v77 = vsel %vm69, %v73, %v57
  %v78 = vrot.slane %v21, 6
  %v79 = vrot.slane %v22, 6
  %v80 = vrot.slane %v23, 6
  %v81 = vrot.slane %v24, 6
  %vm82 = vcmp.lt.s32.totalorder %v26, 2
  %v83 = vsel %vm82, %v80, %v81
  %v84 = vsel %vm82, %v79, %v80
  %v85 = vsel %vm82, %v78, %v79
  %v86 = vsel %vm82, %v81, %v78
  %v87 = vadd.s32 %v74, 4294967294
  %v88 = vadd.s32 %v75, 4294967294
  %v89 = vadd.s32 %v76, 4294967294
  %v90 = vadd.s32 %v77, 4294967294
  %vm91 = vcmp.ge.s32.totalorder %v87, 0
  %vm92 = vcmp.ge.s32.totalorder %v88, 0
  %vm93 = vcmp.ge.s32.totalorder %v89, 0
  %vm94 = vcmp.ge.s32.totalorder %v90, 0
  %vm95 = vcmp.lt.s32.totalorder %v87, 16
  %vm96 = vcmp.lt.s32.totalorder %v88, 16
  %vm97 = vcmp.lt.s32.totalorder %v89, 16
  %vm98 = vcmp.lt.s32.totalorder %v90, 16
  %vm99 = vmand %vm91, %vm95
  %vm100 = vmand %vm92, %vm96
  %vm101 = vmand %vm93, %vm97
  %vm102 = vmand %vm94, %vm98
  %v103 = vsel %vm99, 1, 0
  %v104 = vsel %vm100, 1, 0
  %v105 = vsel %vm101, 1, 0
  %v106 = vsel %vm102, 1, 0
  %vm107 = vcmp.eq.s32.totalorder %v103, 1
  %vm108 = vcmp.eq.s32.totalorder %v104, 1
  %vm109 = vcmp.eq.s32.totalorder %v105, 1
  %vm110 = vcmp.eq.s32.totalorder %v106, 1
  %v111 = vsel %vm107, %v86, 0.0
  %v112 = vsel %vm108, %v85, 0.0
  %v113 = vsel %vm109, %v84, 0.0
  %v114 = vsel %vm110, %v83, 0.0
  %v115 = vrot.slane %v21, 7
  %v116 = vrot.slane %v22, 7
  %v117 = vrot.slane %v23, 7
  %v118 = vrot.slane %v24, 7
  %vm119 = vcmp.lt.s32.totalorder %v26, 1
  %v120 = vsel %vm119, %v117, %v118
  %v121 = vsel %vm119, %v116, %v117
  %v122 = vsel %vm119, %v115, %v116
  %v123 = vsel %vm119, %v118, %v115
  %v124 = vadd.s32 %v74, 4294967295
  %v125 = vadd.s32 %v75, 4294967295
  %v126 = vadd.s32 %v76, 4294967295
  %v127 = vadd.s32 %v77, 4294967295
  %vm128 = vcmp.ge.s32.totalorder %v124, 0
  %vm129 = vcmp.ge.s32.totalorder %v125, 0
  %vm130 = vcmp.ge.s32.totalorder %v126, 0
  %vm131 = vcmp.ge.s32.totalorder %v127, 0
  %vm132 = vcmp.lt.s32.totalorder %v124, 16
  %vm133 = vcmp.lt.s32.totalorder %v125, 16
  %vm134 = vcmp.lt.s32.totalorder %v126, 16
  %vm135 = vcmp.lt.s32.totalorder %v127, 16
  %vm136 = vmand %vm128, %vm132
  %vm137 = vmand %vm129, %vm133
  %vm138 = vmand %vm130, %vm134
  %vm139 = vmand %vm131, %vm135
  %v140 = vsel %vm136, 1, 0
  %v141 = vsel %vm137, 1, 0
  %v142 = vsel %vm138, 1, 0
  %v143 = vsel %vm139, 1, 0
  %vm144 = vcmp.eq.s32.totalorder %v140, 1
  %vm145 = vcmp.eq.s32.totalorder %v141, 1
  %vm146 = vcmp.eq.s32.totalorder %v142, 1
  %vm147 = vcmp.eq.s32.totalorder %v143, 1
  %v148 = vsel %vm144, %v123, 0.0
  %v149 = vsel %vm145, %v122, 0.0
  %v150 = vsel %vm146, %v121, 0.0
  %v151 = vsel %vm147, %v120, 0.0
  %v152 = vrot.slane %v21, 1
  %v153 = vrot.slane %v22, 1
  %v154 = vrot.slane %v23, 1
  %v155 = vrot.slane %v24, 1
  %vm156 = vcmp.lt.s32.totalorder %v26, 7
  %v157 = vsel %vm156, %v154, %v155
  %v158 = vsel %vm156, %v153, %v154
  %v159 = vsel %vm156, %v152, %v153
  %v160 = vsel %vm156, %v155, %v152
  %v161 = vadd.s32 %v74, 1
  %v162 = vadd.s32 %v75, 1
  %v163 = vadd.s32 %v76, 1
  %v164 = vadd.s32 %v77, 1
  %vm165 = vcmp.ge.s32.totalorder %v161, 0
  %vm166 = vcmp.ge.s32.totalorder %v162, 0
  %vm167 = vcmp.ge.s32.totalorder %v163, 0
  %vm168 = vcmp.ge.s32.totalorder %v164, 0
  %vm169 = vcmp.lt.s32.totalorder %v161, 16
  %vm170 = vcmp.lt.s32.totalorder %v162, 16
  %vm171 = vcmp.lt.s32.totalorder %v163, 16
  %vm172 = vcmp.lt.s32.totalorder %v164, 16
  %vm173 = vmand %vm165, %vm169
  %vm174 = vmand %vm166, %vm170
  %vm175 = vmand %vm167, %vm171
  %vm176 = vmand %vm168, %vm172
  %v177 = vsel %vm173, 1, 0
  %v178 = vsel %vm174, 1, 0
  %v179 = vsel %vm175, 1, 0
  %v180 = vsel %vm176, 1, 0
  %vm181 = vcmp.eq.s32.totalorder %v177, 1
  %vm182 = vcmp.eq.s32.totalorder %v178, 1
  %vm183 = vcmp.eq.s32.totalorder %v179, 1
  %vm184 = vcmp.eq.s32.totalorder %v180, 1
  %v185 = vsel %vm181, %v159, 0.0
  %v186 = vsel %vm182, %v158, 0.0
  %v187 = vsel %vm183, %v157, 0.0
  %v188 = vsel %vm184, %v160, 0.0
  %v189 = vrot.slane %v21, 2
  %v190 = vrot.slane %v22, 2
  %v191 = vrot.slane %v23, 2
  %v192 = vrot.slane %v24, 2
  %vm193 = vcmp.lt.s32.totalorder %v26, 6
  %v194 = vsel %vm193, %v191, %v192
  %v195 = vsel %vm193, %v190, %v191
  %v196 = vsel %vm193, %v189, %v190
  %v197 = vsel %vm193, %v192, %v189
  %v198 = vadd.s32 %v74, 2
  %v199 = vadd.s32 %v75, 2
  %v200 = vadd.s32 %v76, 2
  %v201 = vadd.s32 %v77, 2
  %vm202 = vcmp.ge.s32.totalorder %v198, 0
  %vm203 = vcmp.ge.s32.totalorder %v199, 0
  %vm204 = vcmp.ge.s32.totalorder %v200, 0
  %vm205 = vcmp.ge.s32.totalorder %v201, 0
  %vm206 = vcmp.lt.s32.totalorder %v198, 16
  %vm207 = vcmp.lt.s32.totalorder %v199, 16
  %vm208 = vcmp.lt.s32.totalorder %v200, 16
  %vm209 = vcmp.lt.s32.totalorder %v201, 16
  %vm210 = vmand %vm202, %vm206
  %vm211 = vmand %vm203, %vm207
  %vm212 = vmand %vm204, %vm208
  %vm213 = vmand %vm205, %vm209
  %v214 = vsel %vm210, 1, 0
  %v215 = vsel %vm211, 1, 0
  %v216 = vsel %vm212, 1, 0
  %v217 = vsel %vm213, 1, 0
  %vm218 = vcmp.eq.s32.totalorder %v214, 1
  %vm219 = vcmp.eq.s32.totalorder %v215, 1
  %vm220 = vcmp.eq.s32.totalorder %v216, 1
  %vm221 = vcmp.eq.s32.totalorder %v217, 1
  %v222 = vsel %vm218, %v196, 0.0
  %v223 = vsel %vm219, %v195, 0.0
  %v224 = vsel %vm220, %v194, 0.0
  %v225 = vsel %vm221, %v197, 0.0
  %230 = vrot.lane.b32.xlu0 %v148, 8
  %v231 = vpop.permute.xlu0 %230
  %232 = vrot.lane.b32.xlu0 %v149, 8
  %v233 = vpop.permute.xlu0 %232
  %234 = vrot.lane.b32.xlu0 %v150, 8
  %v235 = vpop.permute.xlu0 %234
  %236 = vrot.lane.b32.xlu0 %v151, 8
  %v237 = vpop.permute.xlu0 %236
  %246 = vrot.lane.b32.xlu0 %v21, 16
  %v247 = vpop.permute.xlu0 %246
  %248 = vrot.lane.b32.xlu0 %v22, 16
  %v249 = vpop.permute.xlu0 %248
  %250 = vrot.lane.b32.xlu0 %v23, 16
  %v251 = vpop.permute.xlu0 %250
  %252 = vrot.lane.b32.xlu0 %v24, 16
  %v253 = vpop.permute.xlu0 %252
  %262 = vrot.lane.b32.xlu0 %v185, 24
  %v263 = vpop.permute.xlu0 %262
  %264 = vrot.lane.b32.xlu0 %v186, 24
  %v265 = vpop.permute.xlu0 %264
  %266 = vrot.lane.b32.xlu0 %v187, 24
  %v267 = vpop.permute.xlu0 %266
  %268 = vrot.lane.b32.xlu0 %v188, 24
  %v269 = vpop.permute.xlu0 %268
  %278 = vrot.lane.b32.xlu0 %v222, 32
  %v279 = vpop.permute.xlu0 %278
  %280 = vrot.lane.b32.xlu0 %v223, 32
  %v281 = vpop.permute.xlu0 %280
  %282 = vrot.lane.b32.xlu0 %v224, 32
  %v283 = vpop.permute.xlu0 %282
  %284 = vrot.lane.b32.xlu0 %v225, 32
  %v285 = vpop.permute.xlu0 %284
  %vm290 = vcmask 64512
  %v291 = vsel %vm290, %v111, %v231
  %v292 = vsel %vm290, %v112, %v233
  %v293 = vsel %vm290, %v113, %v235
  %v294 = vsel %vm290, %v114, %v237
  %vm295 = vcmask 130048
  %v296 = vsel %vm295, %v291, %v247
  %v297 = vsel %vm295, %v292, %v249
  %v298 = vsel %vm295, %v293, %v251
  %v299 = vsel %vm295, %v294, %v253
  %vm300 = vcmask 195584
  %v301 = vsel %vm300, %v296, %v263
  %v302 = vsel %vm300, %v297, %v265
  %v303 = vsel %vm300, %v298, %v267
  %v304 = vsel %vm300, %v299, %v269
  %vm305 = vcmask 261120
  %v306 = vsel %vm305, %v301, %v279
  %v307 = vsel %vm305, %v302, %v281
  %v308 = vsel %vm305, %v303, %v283
  %v309 = vsel %vm305, %v304, %v285
  %v310 = vpack.c.bf16 %v307, %v306
  %v311 = vpack.c.bf16 %v309, %v308
  %v312 = vld [vmem:[%s1] sm:$0xf]
  %v313 = vld [vmem:[%s1 + $0x4] sm:$0xf]
  %v314 = vld [vmem:[%s1 + $0x8] sm:$0xf]
  %v315 = vld [vmem:[%s1 + $0xc] sm:$0xf]
  %v316 = vld [vmem:[%s1 + $0x10] sm:$0xf]
  %v322 = vunpack.c.l.b16 %v312
  %v323 = vunpack.c.l.b16 %v313
  %v324 = vunpack.c.l.b16 %v314
  %v325 = vunpack.c.l.b16 %v315
  %v326 = vunpack.c.l.b16 %v316
  %v327 = vpack.c.b16 %v323, %v322
  %v328 = vpack.c.b16 %v325, %v324
  %v329 = vpack.c.b16 %v326, %v326
  %vm332 = vcmask 326656
  %v334 = vsel %vm332, %v310, 0
  %v337 = vsel %vm332, %v311, 0
  %vm339 = vcmask 1043456
  %v341 = vsel %vm339, %v329, 0
  %343 = vmatprep.subr.bf16.mxu0 0
  %344 = vmatpush1.bf16.msra.mxu0 %v327
  %345 = vmatprep.subr.bf16.mxu0 0
  %346 = vmatpush1.bf16.msra.mxu0 %v328
  %347 = vmatprep.subr.bf16.mxu0 0
  %348 = vmatpush1.bf16.msra.mxu0 %v341
  %349 = vmatprep.subr.bf16.mxu0 0
  %350 = vmatpush1.bf16.msra.mxu0 0
  %351 = vmatprep.subr.bf16.mxu0 0
  %352 = vmatpush1.bf16.msra.mxu0 0
  %353 = vmatprep.subr.bf16.mxu0 0
  %354 = vmatpush1.bf16.msra.mxu0 0
  %355 = vmatprep.subr.bf16.mxu0 0
  %356 = vmatpush1.bf16.msra.mxu0 0
  %357 = vmatprep.subr.bf16.mxu0 0
  %358 = vmatpush1.bf16.msra.mxu0 0
  %359 = vmatprep.subr.bf16.mxu0 0
  %360 = vmatpush1.bf16.msra.mxu0 0
  %361 = vmatprep.subr.bf16.mxu0 0
  %362 = vmatpush1.bf16.msra.mxu0 0
  %363 = vmatprep.subr.bf16.mxu0 0
  %364 = vmatpush1.bf16.msra.mxu0 0
  %365 = vmatprep.subr.bf16.mxu0 0
  %366 = vmatpush1.bf16.msra.mxu0 0
  %367 = vmatprep.subr.bf16.mxu0 0
  %368 = vmatpush1.bf16.msra.mxu0 0
  %369 = vmatprep.subr.bf16.mxu0 0
  %370 = vmatpush1.bf16.msra.mxu0 0
  %371 = vmatprep.subr.bf16.mxu0 0
  %372 = vmatpush1.bf16.msra.mxu0 0
  %373 = vmatprep.subr.bf16.mxu0 0
  %374 = vmatpush1.bf16.msra.mxu0 0
  %375 = vmatprep.mubr.bf16.mxu0 0
  %376 = vmatmul.mubr.bf16.gmra.mrb[0].mxu0 %v334
  %v377 = vpop.f32.mrb[0].mxu0
  %v378 = vadd.f32 0.0, %v377
  %v379 = vpop.f32.mrb[0].mxu0
  %v380 = vpop.f32.mrb[0].mxu0
  %v381 = vadd.f32 0.0, %v380
  %v382 = vpop.f32.mrb[0].mxu0
  %383 = vmatprep.mubr.bf16.mxu0 0
  %384 = vmatmul.mubr.bf16.gmra.mrb[0].mxu0 %v337
  %v385 = vpop.f32.mrb[0].mxu0
  %v386 = vadd.f32 0.0, %v385
  %v387 = vpop.f32.mrb[0].mxu0
  %v388 = vpop.f32.mrb[0].mxu0
  %v389 = vadd.f32 0.0, %v388
  %v390 = vpop.f32.mrb[0].mxu0
  %391 = vdwg.mxu0
  %vm392 = vcmask 97280
  %v393 = vsel %vm392, %v378, 0.0
  %v394 = vsel %vm392, %v381, 0.0
  %v395 = vadd.f32 %v393, %v394
  %v396 = vsel %vm392, %v386, 0.0
  %v397 = vadd.f32 %v395, %v396
  %v398 = vsel %vm392, %v389, 0.0
  %v399 = vadd.f32 %v397, %v398
  %v400 = vrot.slane %v399, 4
  %v401 = vadd.f32 %v399, %v400
  %v402 = vrot.slane %v401, 2
  %v403 = vadd.f32 %v401, %v402
  %v404 = vrot.slane %v403, 1
  %v405 = vadd.f32 %v403, %v404
  %v406 = vrcp.pop 32.0
  %v407 = vmul.f32 %v405, %v406
  %v408 = vsub.f32 %v378, %v407
  %v409 = vsub.f32 %v381, %v407
  %v410 = vsub.f32 %v386, %v407
  %v411 = vsub.f32 %v389, %v407
  %v412 = vmul.f32 %v408, %v408
  %v413 = vmul.f32 %v409, %v409
  %v414 = vmul.f32 %v410, %v410
  %v415 = vmul.f32 %v411, %v411
  %v416 = vsel %vm392, %v412, 0.0
  %v417 = vsel %vm392, %v413, 0.0
  %v418 = vadd.f32 %v416, %v417
  %v419 = vsel %vm392, %v414, 0.0
  %v420 = vadd.f32 %v418, %v419
  %v421 = vsel %vm392, %v415, 0.0
  %v422 = vadd.f32 %v420, %v421
  %v423 = vrot.slane %v422, 4
  %v424 = vadd.f32 %v422, %v423
  %v425 = vrot.slane %v424, 2
  %v426 = vadd.f32 %v424, %v425
  %v427 = vrot.slane %v426, 1
  %v428 = vadd.f32 %v426, %v427
  %v429 = vmul.f32 %v428, %v406
  %v430 = vadd.f32 %v429, 1e-05
  %v431 = vrsqrt.pop %v430
  %v432 = vmul.f32 %v408, %v431
  %v433 = vmul.f32 %v409, %v431
  %v434 = vmul.f32 %v410, %v431
  %v435 = vmul.f32 %v411, %v431
  %v436 = vmax.f32 %v432, 0.0
  %v437 = vmax.f32 %v433, 0.0
  %v438 = vmax.f32 %v434, 0.0
  %v439 = vmax.f32 %v435, 0.0
  %v440 = vrot.slane %v436, 6
  %v441 = vrot.slane %v437, 6
  %v442 = vrot.slane %v438, 6
  %v443 = vrot.slane %v439, 6
  %v444 = vsel %vm82, %v442, %v443
  %v445 = vsel %vm82, %v441, %v442
  %v446 = vsel %vm82, %v440, %v441
  %v447 = vsel %vm82, %v443, %v440
  %v448 = vsel %vm107, %v447, 0.0
  %v449 = vsel %vm108, %v446, 0.0
  %v450 = vsel %vm109, %v445, 0.0
  %v451 = vsel %vm110, %v444, 0.0
  %v452 = vrot.slane %v436, 7
  %v453 = vrot.slane %v437, 7
  %v454 = vrot.slane %v438, 7
  %v455 = vrot.slane %v439, 7
  %v456 = vsel %vm119, %v454, %v455
  %v457 = vsel %vm119, %v453, %v454
  %v458 = vsel %vm119, %v452, %v453
  %v459 = vsel %vm119, %v455, %v452
  %v460 = vsel %vm144, %v459, 0.0
  %v461 = vsel %vm145, %v458, 0.0
  %v462 = vsel %vm146, %v457, 0.0
  %v463 = vsel %vm147, %v456, 0.0
  %v464 = vrot.slane %v436, 1
  %v465 = vrot.slane %v437, 1
  %v466 = vrot.slane %v438, 1
  %v467 = vrot.slane %v439, 1
  %v468 = vsel %vm156, %v466, %v467
  %v469 = vsel %vm156, %v465, %v466
  %v470 = vsel %vm156, %v464, %v465
  %v471 = vsel %vm156, %v467, %v464
  %v472 = vsel %vm181, %v470, 0.0
  %v473 = vsel %vm182, %v469, 0.0
  %v474 = vsel %vm183, %v468, 0.0
  %v475 = vsel %vm184, %v471, 0.0
  %v476 = vrot.slane %v436, 2
  %v477 = vrot.slane %v437, 2
  %v478 = vrot.slane %v438, 2
  %v479 = vrot.slane %v439, 2
  %v480 = vsel %vm193, %v478, %v479
  %v481 = vsel %vm193, %v477, %v478
  %v482 = vsel %vm193, %v476, %v477
  %v483 = vsel %vm193, %v479, %v476
  %v484 = vsel %vm218, %v482, 0.0
  %v485 = vsel %vm219, %v481, 0.0
  %v486 = vsel %vm220, %v480, 0.0
  %v487 = vsel %vm221, %v483, 0.0
  %492 = vrot.lane.b32.xlu0 %v460, 12
  %v493 = vpop.permute.xlu0 %492
  %494 = vrot.lane.b32.xlu0 %v461, 12
  %v495 = vpop.permute.xlu0 %494
  %496 = vrot.lane.b32.xlu0 %v462, 12
  %v497 = vpop.permute.xlu0 %496
  %498 = vrot.lane.b32.xlu0 %v463, 12
  %v499 = vpop.permute.xlu0 %498
  %508 = vrot.lane.b32.xlu0 %v436, 24
  %v509 = vpop.permute.xlu0 %508
  %510 = vrot.lane.b32.xlu0 %v437, 24
  %v511 = vpop.permute.xlu0 %510
  %512 = vrot.lane.b32.xlu0 %v438, 24
  %v513 = vpop.permute.xlu0 %512
  %514 = vrot.lane.b32.xlu0 %v439, 24
  %v515 = vpop.permute.xlu0 %514
  %524 = vrot.lane.b32.xlu0 %v472, 36
  %v525 = vpop.permute.xlu0 %524
  %526 = vrot.lane.b32.xlu0 %v473, 36
  %v527 = vpop.permute.xlu0 %526
  %528 = vrot.lane.b32.xlu0 %v474, 36
  %v529 = vpop.permute.xlu0 %528
  %530 = vrot.lane.b32.xlu0 %v475, 36
  %v531 = vpop.permute.xlu0 %530
  %540 = vrot.lane.b32.xlu0 %v484, 48
  %v541 = vpop.permute.xlu0 %540
  %542 = vrot.lane.b32.xlu0 %v485, 48
  %v543 = vpop.permute.xlu0 %542
  %544 = vrot.lane.b32.xlu0 %v486, 48
  %v545 = vpop.permute.xlu0 %544
  %546 = vrot.lane.b32.xlu0 %v487, 48
  %v547 = vpop.permute.xlu0 %546
  %v552 = vsel %vm392, %v448, %v493
  %v553 = vsel %vm392, %v449, %v495
  %v554 = vsel %vm392, %v450, %v497
  %v555 = vsel %vm392, %v451, %v499
  %v556 = vsel %vm300, %v552, %v509
  %v557 = vsel %vm300, %v553, %v511
  %v558 = vsel %vm300, %v554, %v513
  %v559 = vsel %vm300, %v555, %v515
  %vm560 = vcmask 293888
  %v561 = vsel %vm560, %v556, %v525
  %v562 = vsel %vm560, %v557, %v527
  %v563 = vsel %vm560, %v558, %v529
  %v564 = vsel %vm560, %v559, %v531
  %vm565 = vcmask 392192
  %v566 = vsel %vm565, %v561, %v541
  %v567 = vsel %vm565, %v562, %v543
  %v568 = vsel %vm565, %v563, %v545
  %v569 = vsel %vm565, %v564, %v547
  %v570 = vpack.c.bf16 %v567, %v566
  %v571 = vpack.c.bf16 %v569, %v568
  %v572 = vld [vmem:[%s2] sm:$0xf]
  %v573 = vld [vmem:[%s2 + $0x4] sm:$0xf]
  %v574 = vld [vmem:[%s2 + $0x8] sm:$0xf]
  %v575 = vld [vmem:[%s2 + $0xc] sm:$0xf]
  %v576 = vld [vmem:[%s2 + $0x10] sm:$0xf]
  %v577 = vld [vmem:[%s2 + $0x14] sm:$0xf]
  %v578 = vld [vmem:[%s2 + $0x18] sm:$0xf]
  %v579 = vld [vmem:[%s2 + $0x1c] sm:$0x3]
  %v588 = vunpack.c.l.b16 %v572
  %v589 = vunpack.c.l.b16 %v573
  %v590 = vunpack.c.l.b16 %v574
  %v591 = vunpack.c.l.b16 %v575
  %v592 = vunpack.c.l.b16 %v576
  %v593 = vunpack.c.l.b16 %v577
  %v594 = vunpack.c.l.b16 %v578
  %v595 = vunpack.c.l.b16 %v579
  %v596 = vpack.c.b16 %v589, %v588
  %v597 = vpack.c.b16 %v591, %v590
  %v598 = vpack.c.b16 %v593, %v592
  %v599 = vpack.c.b16 %v595, %v594
  %vm603 = vcmask 490496
  %v605 = vsel %vm603, %v570, 0
  %v608 = vsel %vm603, %v571, 0
  %vm610 = vcmask 1045504
  %v612 = vsel %vm610, %v599, 0
  %614 = vmatprep.subr.bf16.mxu0 0
  %615 = vmatpush1.bf16.msra.mxu0 %v596
  %616 = vmatprep.subr.bf16.mxu0 0
  %617 = vmatpush1.bf16.msra.mxu0 %v597
  %618 = vmatprep.subr.bf16.mxu0 0
  %619 = vmatpush1.bf16.msra.mxu0 %v598
  %620 = vmatprep.subr.bf16.mxu0 0
  %621 = vmatpush1.bf16.msra.mxu0 %v612
  %622 = vmatprep.subr.bf16.mxu0 0
  %623 = vmatpush1.bf16.msra.mxu0 0
  %624 = vmatprep.subr.bf16.mxu0 0
  %625 = vmatpush1.bf16.msra.mxu0 0
  %626 = vmatprep.subr.bf16.mxu0 0
  %627 = vmatpush1.bf16.msra.mxu0 0
  %628 = vmatprep.subr.bf16.mxu0 0
  %629 = vmatpush1.bf16.msra.mxu0 0
  %630 = vmatprep.subr.bf16.mxu0 0
  %631 = vmatpush1.bf16.msra.mxu0 0
  %632 = vmatprep.subr.bf16.mxu0 0
  %633 = vmatpush1.bf16.msra.mxu0 0
  %634 = vmatprep.subr.bf16.mxu0 0
  %635 = vmatpush1.bf16.msra.mxu0 0
  %636 = vmatprep.subr.bf16.mxu0 0
  %637 = vmatpush1.bf16.msra.mxu0 0
  %638 = vmatprep.subr.bf16.mxu0 0
  %639 = vmatpush1.bf16.msra.mxu0 0
  %640 = vmatprep.subr.bf16.mxu0 0
  %641 = vmatpush1.bf16.msra.mxu0 0
  %642 = vmatprep.subr.bf16.mxu0 0
  %643 = vmatpush1.bf16.msra.mxu0 0
  %644 = vmatprep.subr.bf16.mxu0 0
  %645 = vmatpush1.bf16.msra.mxu0 0
  %646 = vmatprep.mubr.bf16.mxu0 0
  %647 = vmatmul.mubr.bf16.gmra.mrb[0].mxu0 %v605
  %v648 = vpop.f32.mrb[0].mxu0
  %v649 = vadd.f32 0.0, %v648
  %v650 = vpop.f32.mrb[0].mxu0
  %v651 = vpop.f32.mrb[0].mxu0
  %v652 = vadd.f32 0.0, %v651
  %v653 = vpop.f32.mrb[0].mxu0
  %654 = vmatprep.mubr.bf16.mxu0 0
  %655 = vmatmul.mubr.bf16.gmra.mrb[0].mxu0 %v608
  %v656 = vpop.f32.mrb[0].mxu0
  %v657 = vadd.f32 0.0, %v656
  %v658 = vpop.f32.mrb[0].mxu0
  %v659 = vpop.f32.mrb[0].mxu0
  %v660 = vadd.f32 0.0, %v659
  %v661 = vpop.f32.mrb[0].mxu0
  %662 = vdwg.mxu0
  %v663 = vsel %vm392, %v649, 0.0
  %v664 = vsel %vm392, %v652, 0.0
  %v665 = vadd.f32 %v663, %v664
  %v666 = vsel %vm392, %v657, 0.0
  %v667 = vadd.f32 %v665, %v666
  %v668 = vsel %vm392, %v660, 0.0
  %v669 = vadd.f32 %v667, %v668
  %v670 = vrot.slane %v669, 4
  %v671 = vadd.f32 %v669, %v670
  %v672 = vrot.slane %v671, 2
  %v673 = vadd.f32 %v671, %v672
  %v674 = vrot.slane %v673, 1
  %v675 = vadd.f32 %v673, %v674
  %v676 = vmul.f32 %v675, %v406
  %v677 = vsub.f32 %v649, %v676
  %v678 = vsub.f32 %v652, %v676
  %v679 = vsub.f32 %v657, %v676
  %v680 = vsub.f32 %v660, %v676
  %v681 = vmul.f32 %v677, %v677
  %v682 = vmul.f32 %v678, %v678
  %v683 = vmul.f32 %v679, %v679
  %v684 = vmul.f32 %v680, %v680
  %v685 = vsel %vm392, %v681, 0.0
  %v686 = vsel %vm392, %v682, 0.0
  %v687 = vadd.f32 %v685, %v686
  %v688 = vsel %vm392, %v683, 0.0
  %v689 = vadd.f32 %v687, %v688
  %v690 = vsel %vm392, %v684, 0.0
  %v691 = vadd.f32 %v689, %v690
  %v692 = vrot.slane %v691, 4
  %v693 = vadd.f32 %v691, %v692
  %v694 = vrot.slane %v693, 2
  %v695 = vadd.f32 %v693, %v694
  %v696 = vrot.slane %v695, 1
  %v697 = vadd.f32 %v695, %v696
  %v698 = vmul.f32 %v697, %v406
  %v699 = vadd.f32 %v698, 1e-05
  %v700 = vrsqrt.pop %v699
  %v701 = vmul.f32 %v677, %v700
  %v702 = vmul.f32 %v678, %v700
  %v703 = vmul.f32 %v679, %v700
  %v704 = vmul.f32 %v680, %v700
  %v705 = vmax.f32 %v701, 0.0
  %v706 = vmax.f32 %v702, 0.0
  %v707 = vmax.f32 %v703, 0.0
  %v708 = vmax.f32 %v704, 0.0
  %v709 = vrot.slane %v705, 7
  %v710 = vrot.slane %v706, 7
  %v711 = vrot.slane %v707, 7
  %v712 = vrot.slane %v708, 7
  %v713 = vsel %vm119, %v711, %v712
  %v714 = vsel %vm119, %v710, %v711
  %v715 = vsel %vm119, %v709, %v710
  %v716 = vsel %vm119, %v712, %v709
  %v717 = vsel %vm144, %v716, 0.0
  %v718 = vsel %vm145, %v715, 0.0
  %v719 = vsel %vm146, %v714, 0.0
  %v720 = vsel %vm147, %v713, 0.0
  %v721 = vrot.slane %v705, 1
  %v722 = vrot.slane %v706, 1
  %v723 = vrot.slane %v707, 1
  %v724 = vrot.slane %v708, 1
  %v725 = vsel %vm156, %v723, %v724
  %v726 = vsel %vm156, %v722, %v723
  %v727 = vsel %vm156, %v721, %v722
  %v728 = vsel %vm156, %v724, %v721
  %v729 = vsel %vm181, %v727, 0.0
  %v730 = vsel %vm182, %v726, 0.0
  %v731 = vsel %vm183, %v725, 0.0
  %v732 = vsel %vm184, %v728, 0.0
  %737 = vrot.lane.b32.xlu0 %v705, 12
  %v738 = vpop.permute.xlu0 %737
  %739 = vrot.lane.b32.xlu0 %v706, 12
  %v740 = vpop.permute.xlu0 %739
  %741 = vrot.lane.b32.xlu0 %v707, 12
  %v742 = vpop.permute.xlu0 %741
  %743 = vrot.lane.b32.xlu0 %v708, 12
  %v744 = vpop.permute.xlu0 %743
  %753 = vrot.lane.b32.xlu0 %v729, 24
  %v754 = vpop.permute.xlu0 %753
  %755 = vrot.lane.b32.xlu0 %v730, 24
  %v756 = vpop.permute.xlu0 %755
  %757 = vrot.lane.b32.xlu0 %v731, 24
  %v758 = vpop.permute.xlu0 %757
  %759 = vrot.lane.b32.xlu0 %v732, 24
  %v760 = vpop.permute.xlu0 %759
  %v765 = vsel %vm392, %v717, %v738
  %v766 = vsel %vm392, %v718, %v740
  %v767 = vsel %vm392, %v719, %v742
  %v768 = vsel %vm392, %v720, %v744
  %v769 = vsel %vm300, %v765, %v754
  %v770 = vsel %vm300, %v766, %v756
  %v771 = vsel %vm300, %v767, %v758
  %v772 = vsel %vm300, %v768, %v760
  %v773 = vpack.c.bf16 %v770, %v769
  %v774 = vpack.c.bf16 %v772, %v771
  %v775 = vld [vmem:[%s3] sm:$0xf]
  %v776 = vld [vmem:[%s3 + $0x4] sm:$0xf]
  %v777 = vld [vmem:[%s3 + $0x8] sm:$0xf]
  %v778 = vld [vmem:[%s3 + $0xc] sm:$0xf]
  %v779 = vld [vmem:[%s3 + $0x10] sm:$0x3]
  %v785 = vunpack.c.l.b16 %v775
  %v786 = vunpack.c.l.b16 %v776
  %v787 = vunpack.c.l.b16 %v777
  %v788 = vunpack.c.l.b16 %v778
  %v789 = vunpack.c.l.b16 %v779
  %v790 = vpack.c.b16 %v786, %v785
  %v791 = vpack.c.b16 %v788, %v787
  %v792 = vpack.c.b16 %v789, %v789
  %v796 = vsel %vm560, %v773, 0
  %v799 = vsel %vm560, %v774, 0
  %vm801 = vcmask 1041408
  %v803 = vsel %vm801, %v792, 0
  %805 = vmatprep.subr.bf16.mxu0 0
  %806 = vmatpush1.bf16.msra.mxu0 %v790
  %807 = vmatprep.subr.bf16.mxu0 0
  %808 = vmatpush1.bf16.msra.mxu0 %v791
  %809 = vmatprep.subr.bf16.mxu0 0
  %810 = vmatpush1.bf16.msra.mxu0 %v803
  %811 = vmatprep.subr.bf16.mxu0 0
  %812 = vmatpush1.bf16.msra.mxu0 0
  %813 = vmatprep.subr.bf16.mxu0 0
  %814 = vmatpush1.bf16.msra.mxu0 0
  %815 = vmatprep.subr.bf16.mxu0 0
  %816 = vmatpush1.bf16.msra.mxu0 0
  %817 = vmatprep.subr.bf16.mxu0 0
  %818 = vmatpush1.bf16.msra.mxu0 0
  %819 = vmatprep.subr.bf16.mxu0 0
  %820 = vmatpush1.bf16.msra.mxu0 0
  %821 = vmatprep.subr.bf16.mxu0 0
  %822 = vmatpush1.bf16.msra.mxu0 0
  %823 = vmatprep.subr.bf16.mxu0 0
  %824 = vmatpush1.bf16.msra.mxu0 0
  %825 = vmatprep.subr.bf16.mxu0 0
  %826 = vmatpush1.bf16.msra.mxu0 0
  %827 = vmatprep.subr.bf16.mxu0 0
  %828 = vmatpush1.bf16.msra.mxu0 0
  %829 = vmatprep.subr.bf16.mxu0 0
  %830 = vmatpush1.bf16.msra.mxu0 0
  %831 = vmatprep.subr.bf16.mxu0 0
  %832 = vmatpush1.bf16.msra.mxu0 0
  %833 = vmatprep.subr.bf16.mxu0 0
  %834 = vmatpush1.bf16.msra.mxu0 0
  %835 = vmatprep.subr.bf16.mxu0 0
  %836 = vmatpush1.bf16.msra.mxu0 0
  %837 = vmatprep.mubr.bf16.mxu0 0
  %838 = vmatmul.mubr.bf16.gmra.mrb[0].mxu0 %v796
  %v839 = vpop.f32.mrb[0].mxu0
  %v840 = vadd.f32 0.0, %v839
  %v841 = vpop.f32.mrb[0].mxu0
  %v842 = vpop.f32.mrb[0].mxu0
  %v843 = vadd.f32 0.0, %v842
  %v844 = vpop.f32.mrb[0].mxu0
  %845 = vmatprep.mubr.bf16.mxu0 0
  %846 = vmatmul.mubr.bf16.gmra.mrb[0].mxu0 %v799
  %v847 = vpop.f32.mrb[0].mxu0
  %v848 = vadd.f32 0.0, %v847
  %v849 = vpop.f32.mrb[0].mxu0
  %v850 = vpop.f32.mrb[0].mxu0
  %v851 = vadd.f32 0.0, %v850
  %v852 = vpop.f32.mrb[0].mxu0
  %853 = vdwg.mxu0
  %v854 = vsel %vm290, %v840, 0.0
  %v855 = vsel %vm290, %v843, 0.0
  %v856 = vadd.f32 %v854, %v855
  %v857 = vsel %vm290, %v848, 0.0
  %v858 = vadd.f32 %v856, %v857
  %v859 = vsel %vm290, %v851, 0.0
  %v860 = vadd.f32 %v858, %v859
  %v861 = vrot.slane %v860, 4
  %v862 = vadd.f32 %v860, %v861
  %v863 = vrot.slane %v862, 2
  %v864 = vadd.f32 %v862, %v863
  %v865 = vrot.slane %v864, 1
  %v866 = vadd.f32 %v864, %v865
  %v867 = vmul.f32 %v866, %v406
  %v868 = vsub.f32 %v840, %v867
  %v869 = vsub.f32 %v843, %v867
  %v870 = vsub.f32 %v848, %v867
  %v871 = vsub.f32 %v851, %v867
  %v872 = vmul.f32 %v868, %v868
  %v873 = vmul.f32 %v869, %v869
  %v874 = vmul.f32 %v870, %v870
  %v875 = vmul.f32 %v871, %v871
  %v876 = vsel %vm290, %v872, 0.0
  %v877 = vsel %vm290, %v873, 0.0
  %v878 = vadd.f32 %v876, %v877
  %v879 = vsel %vm290, %v874, 0.0
  %v880 = vadd.f32 %v878, %v879
  %v881 = vsel %vm290, %v875, 0.0
  %v882 = vadd.f32 %v880, %v881
  %v883 = vrot.slane %v882, 4
  %v884 = vadd.f32 %v882, %v883
  %v885 = vrot.slane %v884, 2
  %v886 = vadd.f32 %v884, %v885
  %v887 = vrot.slane %v886, 1
  %v888 = vadd.f32 %v886, %v887
  %v889 = vmul.f32 %v888, %v406
  %v890 = vadd.f32 %v889, 1e-05
  %v891 = vrsqrt.pop %v890
  %v892 = vmul.f32 %v868, %v891
  %v893 = vmul.f32 %v869, %v891
  %v894 = vmul.f32 %v870, %v891
  %v895 = vmul.f32 %v871, %v891
  %v896 = vpack.c.bf16 %v22, %v21
  %v897 = vpack.c.bf16 %v24, %v23
  %v898 = vld [vmem:[%s4] sm:$0xf]
  %v900 = vsel %vm290, %v896, 0
  %v903 = vsel %vm290, %v897, 0
  %v906 = vsel %vm339, %v898, 0
  %908 = vmatprep.subr.bf16.mxu0 0
  %909 = vmatpush1.bf16.msra.mxu0 %v906
  %910 = vmatprep.subr.bf16.mxu0 0
  %911 = vmatpush1.bf16.msra.mxu0 0
  %912 = vmatprep.subr.bf16.mxu0 0
  %913 = vmatpush1.bf16.msra.mxu0 0
  %914 = vmatprep.subr.bf16.mxu0 0
  %915 = vmatpush1.bf16.msra.mxu0 0
  %916 = vmatprep.subr.bf16.mxu0 0
  %917 = vmatpush1.bf16.msra.mxu0 0
  %918 = vmatprep.subr.bf16.mxu0 0
  %919 = vmatpush1.bf16.msra.mxu0 0
  %920 = vmatprep.subr.bf16.mxu0 0
  %921 = vmatpush1.bf16.msra.mxu0 0
  %922 = vmatprep.subr.bf16.mxu0 0
  %923 = vmatpush1.bf16.msra.mxu0 0
  %924 = vmatprep.subr.bf16.mxu0 0
  %925 = vmatpush1.bf16.msra.mxu0 0
  %926 = vmatprep.subr.bf16.mxu0 0
  %927 = vmatpush1.bf16.msra.mxu0 0
  %928 = vmatprep.subr.bf16.mxu0 0
  %929 = vmatpush1.bf16.msra.mxu0 0
  %930 = vmatprep.subr.bf16.mxu0 0
  %931 = vmatpush1.bf16.msra.mxu0 0
  %932 = vmatprep.subr.bf16.mxu0 0
  %933 = vmatpush1.bf16.msra.mxu0 0
  %934 = vmatprep.subr.bf16.mxu0 0
  %935 = vmatpush1.bf16.msra.mxu0 0
  %936 = vmatprep.subr.bf16.mxu0 0
  %937 = vmatpush1.bf16.msra.mxu0 0
  %938 = vmatprep.subr.bf16.mxu0 0
  %939 = vmatpush1.bf16.msra.mxu0 0
  %940 = vmatprep.mubr.bf16.mxu0 0
  %941 = vmatmul.mubr.bf16.gmra.mrb[0].mxu0 %v900
  %v942 = vpop.f32.mrb[0].mxu0
  %v943 = vadd.f32 0.0, %v942
  %v944 = vpop.f32.mrb[0].mxu0
  %v945 = vpop.f32.mrb[0].mxu0
  %v946 = vadd.f32 0.0, %v945
  %v947 = vpop.f32.mrb[0].mxu0
  %948 = vmatprep.mubr.bf16.mxu0 0
  %949 = vmatmul.mubr.bf16.gmra.mrb[0].mxu0 %v903
  %v950 = vpop.f32.mrb[0].mxu0
  %v951 = vadd.f32 0.0, %v950
  %v952 = vpop.f32.mrb[0].mxu0
  %v953 = vpop.f32.mrb[0].mxu0
  %v954 = vadd.f32 0.0, %v953
  %v955 = vpop.f32.mrb[0].mxu0
  %956 = vdwg.mxu0
  %v957 = vsel %vm290, %v943, 0.0
  %v958 = vsel %vm290, %v946, 0.0
  %v959 = vadd.f32 %v957, %v958
  %v960 = vsel %vm290, %v951, 0.0
  %v961 = vadd.f32 %v959, %v960
  %v962 = vsel %vm290, %v954, 0.0
  %v963 = vadd.f32 %v961, %v962
  %v964 = vrot.slane %v963, 4
  %v965 = vadd.f32 %v963, %v964
  %v966 = vrot.slane %v965, 2
  %v967 = vadd.f32 %v965, %v966
  %v968 = vrot.slane %v967, 1
  %v969 = vadd.f32 %v967, %v968
  %v970 = vmul.f32 %v969, %v406
  %v971 = vsub.f32 %v943, %v970
  %v972 = vsub.f32 %v946, %v970
  %v973 = vsub.f32 %v951, %v970
  %v974 = vsub.f32 %v954, %v970
  %v975 = vmul.f32 %v971, %v971
  %v976 = vmul.f32 %v972, %v972
  %v977 = vmul.f32 %v973, %v973
  %v978 = vmul.f32 %v974, %v974
  %v979 = vsel %vm290, %v975, 0.0
  %v980 = vsel %vm290, %v976, 0.0
  %v981 = vadd.f32 %v979, %v980
  %v982 = vsel %vm290, %v977, 0.0
  %v983 = vadd.f32 %v981, %v982
  %v984 = vsel %vm290, %v978, 0.0
  %v985 = vadd.f32 %v983, %v984
  %v986 = vrot.slane %v985, 4
  %v987 = vadd.f32 %v985, %v986
  %v988 = vrot.slane %v987, 2
  %v989 = vadd.f32 %v987, %v988
  %v990 = vrot.slane %v989, 1
  %v991 = vadd.f32 %v989, %v990
  %v992 = vmul.f32 %v991, %v406
  %v993 = vadd.f32 %v992, 1e-05
  %v994 = vrsqrt.pop %v993
  %v995 = vmul.f32 %v971, %v994
  %v996 = vmul.f32 %v972, %v994
  %v997 = vmul.f32 %v973, %v994
  %v998 = vmul.f32 %v974, %v994
  %v999 = vadd.f32 %v892, %v995
  %v1000 = vadd.f32 %v893, %v996
  %v1001 = vadd.f32 %v894, %v997
  %v1002 = vadd.f32 %v895, %v998
  %v1003 = vmax.f32 %v999, 0.0
  %v1004 = vmax.f32 %v1000, 0.0
  %v1005 = vmax.f32 %v1001, 0.0
  %v1006 = vmax.f32 %v1002, 0.0
  %1007 = vst.msk [vmem:[%s5] sm:$0xff] %vm290, %v1003
  %1008 = vst.msk [vmem:[%s5 + $0x8] sm:$0xff] %vm290, %v1004
  %1009 = vst.msk [vmem:[%s5 + $0x10] sm:$0xff] %vm290, %v1005
  %1010 = vst.msk [vmem:[%s5 + $0x18] sm:$0xff] %vm290, %v1006
  // Predicated region
  $region22: #{forward.3} parent=0 // pred_check
    _
  $region23: #{forward.3} parent=0 // pred_check_branch
    %1012 = sbr.rel (0) target = $region25
  $region24: #{forward.3} parent=0 // pred_region
    _
  $region25: #{forward.3} parent=0 // pred_fallthru
    _
  // Predicated region
  $region26: #{forward.3} parent=0 // pred_check
    _
  $region27: #{forward.3} parent=0 // pred_check_branch
    %1014 = sbr.rel (0) target = $region29
  $region28: #{forward.3} parent=0 // pred_region
    _
  $region29: #{forward.3} parent=0 // pred_fallthru
    _

// kernel: forward.2
$region0: #{forward.2}
  #allocation0 [shape = 'u32[]', space=smem, size = 0x4, offset = 0x4, fixed_abs, tag = 'smem constant byte address 0x4 - core index']
  #allocation1 [shape = 'u32[144,128]{1,0:T(1,128)}', space=vmem, size = 0x12000, scoped, tag = 'internal scratch']
  %s0 = inlined_call_operand.vmem [shape: f32[2,16,1], index: 0, kind: input, shape index: {}]
  %s1 = inlined_call_operand.vmem [shape: f32[5,12], index: 1, kind: input, shape index: {}]
  %s2 = inlined_call_operand.vmem [shape: bf16[60,12], index: 2, kind: input, shape index: {}]
  %s3 = inlined_call_operand.vmem [shape: bf16[36,8], index: 3, kind: input, shape index: {}]
  %s4 = inlined_call_operand.vmem [shape: f32[1,8], index: 4, kind: input, shape index: {}]
  %s5 = inlined_call_operand.vmem [shape: f32[2,16,8], index: 5, kind: output, shape index: {}]
  %s6 = sld [smem:[#allocation0]]
  $region30: #{forward.2} parent=0
    _
  %s8 = ssub.s32 1, %s6
  %s9 = scalar_select 0, %s8, %s6
  // Predicated region
  $region2: #{forward.2} parent=0 // pred_check
    _
  $region3: #{forward.2} parent=0 // pred_check_branch
    %11 = sbr.rel (0) target = $region5
  $region4: #{forward.2} parent=0 // pred_region
    _
  $region5: #{forward.2} parent=0 // pred_fallthru
    _
  // Predicated region
  $region6: #{forward.2} parent=0 // pred_check
    _
  $region7: #{forward.2} parent=0 // pred_check_branch
    %13 = sbr.rel (0) target = $region9
  $region8: #{forward.2} parent=0 // pred_region
    _
  $region9: #{forward.2} parent=0 // pred_fallthru
    _
  // Predicated region
  $region10: #{forward.2} parent=0 // pred_check
    _
  $region11: #{forward.2} parent=0 // pred_check_branch
    %15 = sbr.rel (0) target = $region13
  $region12: #{forward.2} parent=0 // pred_region
    _
  $region13: #{forward.2} parent=0 // pred_fallthru
    _
  // Predicated region
  $region14: #{forward.2} parent=0 // pred_check
    _
  $region15: #{forward.2} parent=0 // pred_check_branch
    %17 = sbr.rel (0) target = $region17
  $region16: #{forward.2} parent=0 // pred_region
    _
  $region17: #{forward.2} parent=0 // pred_fallthru
    _
  // Predicated region
  $region18: #{forward.2} parent=0 // pred_check
    _
  $region19: #{forward.2} parent=0 // pred_check_branch
    %19 = sbr.rel (0) target = $region21
  $region20: #{forward.2} parent=0 // pred_region
    _
  $region21: #{forward.2} parent=0 // pred_fallthru
    _
  %v21 = vld [vmem:[%s0] sm:$0xff]
  %v22 = vld [vmem:[%s0 + $0x8] sm:$0xff]
  %v23 = vld [vmem:[%s0 + $0x10] sm:$0xff]
  %v24 = vld [vmem:[%s0 + $0x18] sm:$0xff]
  %v25 = vlaneseq
  %v26 = vshrl.u32 %v25, 7
  %v27 = vadd.s32 %v26, 8
  %v28 = vadd.s32 %v26, 16
  %v29 = vadd.s32 %v26, 24
  %vm30 = vcmp.lt.s32.totalorder %v26, 0
  %v31 = vsub.s32 0, %v26
  %v32 = vsel %vm30, %v31, %v26
  %v33 = vshrl.u32 %v32, 4
  %v34 = vand.u32 %v32, 15
  %v35 = vsub.s32 0, %v34
  %v36 = vsel %vm30, %v35, %v34
  %vm37 = vcmp.lt.s32.totalorder %v27, 0
  %v38 = vsub.s32 0, %v27
  %v39 = vsel %vm37, %v38, %v27
  %v40 = vshrl.u32 %v39, 4
  %v41 = vand.u32 %v39, 15
  %v42 = vsub.s32 0, %v41
  %v43 = vsel %vm37, %v42, %v41
  %vm44 = vcmp.lt.s32.totalorder %v28, 0
  %v45 = vsub.s32 0, %v28
  %v46 = vsel %vm44, %v45, %v28
  %v47 = vshrl.u32 %v46, 4
  %v48 = vand.u32 %v46, 15
  %v49 = vsub.s32 0, %v48
  %v50 = vsel %vm44, %v49, %v48
  %vm51 = vcmp.lt.s32.totalorder %v29, 0
  %v52 = vsub.s32 0, %v29
  %v53 = vsel %vm51, %v52, %v29
  %v54 = vshrl.u32 %v53, 4
  %v55 = vand.u32 %v53, 15
  %v56 = vsub.s32 0, %v55
  %v57 = vsel %vm51, %v56, %v55
  %vm58 = vcmp.ne.s32.totalorder %v36, 0
  %vm59 = vcmp.ne.s32.totalorder %v43, 0
  %vm60 = vcmp.ne.s32.totalorder %v50, 0
  %vm61 = vcmp.ne.s32.totalorder %v57, 0
  %vm62 = vcmp.lt.s32.totalorder %v36, 0
  %vm63 = vcmp.lt.s32.totalorder %v43, 0
  %vm64 = vcmp.lt.s32.totalorder %v50, 0
  %vm65 = vcmp.lt.s32.totalorder %v57, 0
  %vm66 = vmand %vm62, %vm58
  %vm67 = vmand %vm63, %vm59
  %vm68 = vmand %vm64, %vm60
  %vm69 = vmand %vm65, %vm61
  %v70 = vadd.s32 %v36, 16
  %v71 = vadd.s32 %v43, 16
  %v72 = vadd.s32 %v50, 16
  %v73 = vadd.s32 %v57, 16
  %v74 = vsel %vm66, %v70, %v36
  %v75 = vsel %vm67, %v71, %v43
  %v76 = vsel %vm68, %v72, %v50
  %v77 = vsel %vm69, %v73, %v57
  %v78 = vrot.slane %v21, 6
  %v79 = vrot.slane %v22, 6
  %v80 = vrot.slane %v23, 6
  %v81 = vrot.slane %v24, 6
  %vm82 = vcmp.lt.s32.totalorder %v26, 2
  %v83 = vsel %vm82, %v80, %v81
  %v84 = vsel %vm82, %v79, %v80
  %v85 = vsel %vm82, %v78, %v79
  %v86 = vsel %vm82, %v81, %v78
  %v87 = vadd.s32 %v74, 4294967294
  %v88 = vadd.s32 %v75, 4294967294
  %v89 = vadd.s32 %v76, 4294967294
  %v90 = vadd.s32 %v77, 4294967294
  %vm91 = vcmp.ge.s32.totalorder %v87, 0
  %vm92 = vcmp.ge.s32.totalorder %v88, 0
  %vm93 = vcmp.ge.s32.totalorder %v89, 0
  %vm94 = vcmp.ge.s32.totalorder %v90, 0
  %vm95 = vcmp.lt.s32.totalorder %v87, 16
  %vm96 = vcmp.lt.s32.totalorder %v88, 16
  %vm97 = vcmp.lt.s32.totalorder %v89, 16
  %vm98 = vcmp.lt.s32.totalorder %v90, 16
  %vm99 = vmand %vm91, %vm95
  %vm100 = vmand %vm92, %vm96
  %vm101 = vmand %vm93, %vm97
  %vm102 = vmand %vm94, %vm98
  %v103 = vsel %vm99, %v86, 0.0
  %v104 = vsel %vm100, %v85, 0.0
  %v105 = vsel %vm101, %v84, 0.0
  %v106 = vsel %vm102, %v83, 0.0
  %v107 = vrot.slane %v21, 7
  %v108 = vrot.slane %v22, 7
  %v109 = vrot.slane %v23, 7
  %v110 = vrot.slane %v24, 7
  %vm111 = vcmp.lt.s32.totalorder %v26, 1
  %v112 = vsel %vm111, %v109, %v110
  %v113 = vsel %vm111, %v108, %v109
  %v114 = vsel %vm111, %v107, %v108
  %v115 = vsel %vm111, %v110, %v107
  %v116 = vadd.s32 %v74, 4294967295
  %v117 = vadd.s32 %v75, 4294967295
  %v118 = vadd.s32 %v76, 4294967295
  %v119 = vadd.s32 %v77, 4294967295
  %vm120 = vcmp.ge.s32.totalorder %v116, 0
  %vm121 = vcmp.ge.s32.totalorder %v117, 0
  %vm122 = vcmp.ge.s32.totalorder %v118, 0
  %vm123 = vcmp.ge.s32.totalorder %v119, 0
  %vm124 = vcmp.lt.s32.totalorder %v116, 16
  %vm125 = vcmp.lt.s32.totalorder %v117, 16
  %vm126 = vcmp.lt.s32.totalorder %v118, 16
  %vm127 = vcmp.lt.s32.totalorder %v119, 16
  %vm128 = vmand %vm120, %vm124
  %vm129 = vmand %vm121, %vm125
  %vm130 = vmand %vm122, %vm126
  %vm131 = vmand %vm123, %vm127
  %v132 = vsel %vm128, %v115, 0.0
  %v133 = vsel %vm129, %v114, 0.0
  %v134 = vsel %vm130, %v113, 0.0
  %v135 = vsel %vm131, %v112, 0.0
  %v136 = vrot.slane %v21, 1
  %v137 = vrot.slane %v22, 1
  %v138 = vrot.slane %v23, 1
  %v139 = vrot.slane %v24, 1
  %vm140 = vcmp.lt.s32.totalorder %v26, 7
  %v141 = vsel %vm140, %v138, %v139
  %v142 = vsel %vm140, %v137, %v138
  %v143 = vsel %vm140, %v136, %v137
  %v144 = vsel %vm140, %v139, %v136
  %v145 = vadd.s32 %v74, 1
  %v146 = vadd.s32 %v75, 1
  %v147 = vadd.s32 %v76, 1
  %v148 = vadd.s32 %v77, 1
  %vm149 = vcmp.ge.s32.totalorder %v145, 0
  %vm150 = vcmp.ge.s32.totalorder %v146, 0
  %vm151 = vcmp.ge.s32.totalorder %v147, 0
  %vm152 = vcmp.ge.s32.totalorder %v148, 0
  %vm153 = vcmp.lt.s32.totalorder %v145, 16
  %vm154 = vcmp.lt.s32.totalorder %v146, 16
  %vm155 = vcmp.lt.s32.totalorder %v147, 16
  %vm156 = vcmp.lt.s32.totalorder %v148, 16
  %vm157 = vmand %vm149, %vm153
  %vm158 = vmand %vm150, %vm154
  %vm159 = vmand %vm151, %vm155
  %vm160 = vmand %vm152, %vm156
  %v161 = vsel %vm157, %v143, 0.0
  %v162 = vsel %vm158, %v142, 0.0
  %v163 = vsel %vm159, %v141, 0.0
  %v164 = vsel %vm160, %v144, 0.0
  %v165 = vrot.slane %v21, 2
  %v166 = vrot.slane %v22, 2
  %v167 = vrot.slane %v23, 2
  %v168 = vrot.slane %v24, 2
  %vm169 = vcmp.lt.s32.totalorder %v26, 6
  %v170 = vsel %vm169, %v167, %v168
  %v171 = vsel %vm169, %v166, %v167
  %v172 = vsel %vm169, %v165, %v166
  %v173 = vsel %vm169, %v168, %v165
  %v174 = vadd.s32 %v74, 2
  %v175 = vadd.s32 %v75, 2
  %v176 = vadd.s32 %v76, 2
  %v177 = vadd.s32 %v77, 2
  %vm178 = vcmp.ge.s32.totalorder %v174, 0
  %vm179 = vcmp.ge.s32.totalorder %v175, 0
  %vm180 = vcmp.ge.s32.totalorder %v176, 0
  %vm181 = vcmp.ge.s32.totalorder %v177, 0
  %vm182 = vcmp.lt.s32.totalorder %v174, 16
  %vm183 = vcmp.lt.s32.totalorder %v175, 16
  %vm184 = vcmp.lt.s32.totalorder %v176, 16
  %vm185 = vcmp.lt.s32.totalorder %v177, 16
  %vm186 = vmand %vm178, %vm182
  %vm187 = vmand %vm179, %vm183
  %vm188 = vmand %vm180, %vm184
  %vm189 = vmand %vm181, %vm185
  %v190 = vsel %vm186, %v172, 0.0
  %v191 = vsel %vm187, %v171, 0.0
  %v192 = vsel %vm188, %v170, 0.0
  %v193 = vsel %vm189, %v173, 0.0
  %v194 = vld [vmem:[%s1] sm:$0x1f]
  %196 = vset.pattern.permute.xlu0 0
  %197 = vperm.xlu0 %196, %v103
  %v198 = vpop.permute.xlu0 %197
  %201 = vset.pattern.permute.xlu0 0
  %202 = vperm.xlu0 %201, %v104
  %v203 = vpop.permute.xlu0 %202
  %206 = vset.pattern.permute.xlu0 0
  %207 = vperm.xlu0 %206, %v105
  %v208 = vpop.permute.xlu0 %207
  %211 = vset.pattern.permute.xlu0 0
  %212 = vperm.xlu0 %211, %v106
  %v213 = vpop.permute.xlu0 %212
  %v215 = vlaneseq
  %v216 = vshrl.u32 %v215, 7
  %v217 = vsub.s32 0, %v216
  %v218 = vrot.slane %v194, %v217
  %v219 = vmul.f32 %v198, %v218
  %v220 = vmul.f32 %v203, %v218
  %v221 = vmul.f32 %v208, %v218
  %v222 = vmul.f32 %v213, %v218
  %v223 = vadd.f32 %v219, 0.0
  %v224 = vadd.f32 %v220, 0.0
  %v225 = vadd.f32 %v221, 0.0
  %v226 = vadd.f32 %v222, 0.0
  %228 = vset.pattern.permute.xlu0 0
  %229 = vperm.xlu0 %228, %v132
  %v230 = vpop.permute.xlu0 %229
  %233 = vset.pattern.permute.xlu0 0
  %234 = vperm.xlu0 %233, %v133
  %v235 = vpop.permute.xlu0 %234
  %238 = vset.pattern.permute.xlu0 0
  %239 = vperm.xlu0 %238, %v134
  %v240 = vpop.permute.xlu0 %239
  %243 = vset.pattern.permute.xlu0 0
  %244 = vperm.xlu0 %243, %v135
  %v245 = vpop.permute.xlu0 %244
  %v247 = vlaneseq
  %v248 = vshrl.u32 %v247, 7
  %v249 = vsub.s32 1, %v248
  %v250 = vrot.slane %v194, %v249
  %v251 = vmul.f32 %v230, %v250
  %v252 = vmul.f32 %v235, %v250
  %v253 = vmul.f32 %v240, %v250
  %v254 = vmul.f32 %v245, %v250
  %v255 = vadd.f32 %v223, %v251
  %v256 = vadd.f32 %v224, %v252
  %v257 = vadd.f32 %v225, %v253
  %v258 = vadd.f32 %v226, %v254
  %260 = vset.pattern.permute.xlu0 0
  %261 = vperm.xlu0 %260, %v21
  %v262 = vpop.permute.xlu0 %261
  %265 = vset.pattern.permute.xlu0 0
  %266 = vperm.xlu0 %265, %v22
  %v267 = vpop.permute.xlu0 %266
  %270 = vset.pattern.permute.xlu0 0
  %271 = vperm.xlu0 %270, %v23
  %v272 = vpop.permute.xlu0 %271
  %275 = vset.pattern.permute.xlu0 0
  %276 = vperm.xlu0 %275, %v24
  %v277 = vpop.permute.xlu0 %276
  %v279 = vlaneseq
  %v280 = vshrl.u32 %v279, 7
  %v281 = vsub.s32 2, %v280
  %v282 = vrot.slane %v194, %v281
  %v283 = vmul.f32 %v262, %v282
  %v284 = vmul.f32 %v267, %v282
  %v285 = vmul.f32 %v272, %v282
  %v286 = vmul.f32 %v277, %v282
  %v287 = vadd.f32 %v255, %v283
  %v288 = vadd.f32 %v256, %v284
  %v289 = vadd.f32 %v257, %v285
  %v290 = vadd.f32 %v258, %v286
  %292 = vset.pattern.permute.xlu0 0
  %293 = vperm.xlu0 %292, %v161
  %v294 = vpop.permute.xlu0 %293
  %297 = vset.pattern.permute.xlu0 0
  %298 = vperm.xlu0 %297, %v162
  %v299 = vpop.permute.xlu0 %298
  %302 = vset.pattern.permute.xlu0 0
  %303 = vperm.xlu0 %302, %v163
  %v304 = vpop.permute.xlu0 %303
  %307 = vset.pattern.permute.xlu0 0
  %308 = vperm.xlu0 %307, %v164
  %v309 = vpop.permute.xlu0 %308
  %v311 = vlaneseq
  %v312 = vshrl.u32 %v311, 7
  %v313 = vsub.s32 3, %v312
  %v314 = vrot.slane %v194, %v313
  %v315 = vmul.f32 %v294, %v314
  %v316 = vmul.f32 %v299, %v314
  %v317 = vmul.f32 %v304, %v314
  %v318 = vmul.f32 %v309, %v314
  %v319 = vadd.f32 %v287, %v315
  %v320 = vadd.f32 %v288, %v316
  %v321 = vadd.f32 %v289, %v317
  %v322 = vadd.f32 %v290, %v318
  %324 = vset.pattern.permute.xlu0 0
  %325 = vperm.xlu0 %324, %v190
  %v326 = vpop.permute.xlu0 %325
  %329 = vset.pattern.permute.xlu0 0
  %330 = vperm.xlu0 %329, %v191
  %v331 = vpop.permute.xlu0 %330
  %334 = vset.pattern.permute.xlu0 0
  %335 = vperm.xlu0 %334, %v192
  %v336 = vpop.permute.xlu0 %335
  %339 = vset.pattern.permute.xlu0 0
  %340 = vperm.xlu0 %339, %v193
  %v341 = vpop.permute.xlu0 %340
  %v343 = vlaneseq
  %v344 = vshrl.u32 %v343, 7
  %v345 = vsub.s32 4, %v344
  %v346 = vrot.slane %v194, %v345
  %v347 = vmul.f32 %v326, %v346
  %v348 = vmul.f32 %v331, %v346
  %v349 = vmul.f32 %v336, %v346
  %v350 = vmul.f32 %v341, %v346
  %v351 = vadd.f32 %v319, %v347
  %v352 = vadd.f32 %v320, %v348
  %v353 = vadd.f32 %v321, %v349
  %v354 = vadd.f32 %v322, %v350
  %vm355 = vcmask 97280
  %v356 = vsel %vm355, %v351, 0.0
  %v357 = vsel %vm355, %v352, 0.0
  %v358 = vadd.f32 %v356, %v357
  %v359 = vsel %vm355, %v353, 0.0
  %v360 = vadd.f32 %v358, %v359
  %v361 = vsel %vm355, %v354, 0.0
  %v362 = vadd.f32 %v360, %v361
  %v363 = vrot.slane %v362, 4
  %v364 = vadd.f32 %v362, %v363
  %v365 = vrot.slane %v364, 2
  %v366 = vadd.f32 %v364, %v365
  %v367 = vrot.slane %v366, 1
  %v368 = vadd.f32 %v366, %v367
  %v369 = vrcp.pop 32.0
  %v370 = vmul.f32 %v368, %v369
  %v371 = vsub.f32 %v351, %v370
  %v372 = vsub.f32 %v352, %v370
  %v373 = vsub.f32 %v353, %v370
  %v374 = vsub.f32 %v354, %v370
  %v375 = vmul.f32 %v371, %v371
  %v376 = vmul.f32 %v372, %v372
  %v377 = vmul.f32 %v373, %v373
  %v378 = vmul.f32 %v374, %v374
  %v379 = vsel %vm355, %v375, 0.0
  %v380 = vsel %vm355, %v376, 0.0
  %v381 = vadd.f32 %v379, %v380
  %v382 = vsel %vm355, %v377, 0.0
  %v383 = vadd.f32 %v381, %v382
  %v384 = vsel %vm355, %v378, 0.0
  %v385 = vadd.f32 %v383, %v384
  %v386 = vrot.slane %v385, 4
  %v387 = vadd.f32 %v385, %v386
  %v388 = vrot.slane %v387, 2
  %v389 = vadd.f32 %v387, %v388
  %v390 = vrot.slane %v389, 1
  %v391 = vadd.f32 %v389, %v390
  %v392 = vmul.f32 %v391, %v369
  %v393 = vadd.f32 %v392, 1e-05
  %v394 = vrsqrt.pop %v393
  %v395 = vmul.f32 %v371, %v394
  %v396 = vmul.f32 %v372, %v394
  %v397 = vmul.f32 %v373, %v394
  %v398 = vmul.f32 %v374, %v394
  %v399 = vmax.f32 %v395, 0.0
  %v400 = vmax.f32 %v396, 0.0
  %v401 = vmax.f32 %v397, 0.0
  %v402 = vmax.f32 %v398, 0.0
  %v403 = vrot.slane %v399, 6
  %v404 = vrot.slane %v400, 6
  %v405 = vrot.slane %v401, 6
  %v406 = vrot.slane %v402, 6
  %v407 = vsel %vm82, %v405, %v406
  %v408 = vsel %vm82, %v404, %v405
  %v409 = vsel %vm82, %v403, %v404
  %v410 = vsel %vm82, %v406, %v403
  %v411 = vsel %vm99, 1, 0
  %v412 = vsel %vm100, 1, 0
  %v413 = vsel %vm101, 1, 0
  %v414 = vsel %vm102, 1, 0
  %vm415 = vcmp.eq.s32.totalorder %v411, 1
  %vm416 = vcmp.eq.s32.totalorder %v412, 1
  %vm417 = vcmp.eq.s32.totalorder %v413, 1
  %vm418 = vcmp.eq.s32.totalorder %v414, 1
  %v419 = vsel %vm415, %v410, 0.0
  %v420 = vsel %vm416, %v409, 0.0
  %v421 = vsel %vm417, %v408, 0.0
  %v422 = vsel %vm418, %v407, 0.0
  %v423 = vrot.slane %v399, 7
  %v424 = vrot.slane %v400, 7
  %v425 = vrot.slane %v401, 7
  %v426 = vrot.slane %v402, 7
  %v427 = vsel %vm111, %v425, %v426
  %v428 = vsel %vm111, %v424, %v425
  %v429 = vsel %vm111, %v423, %v424
  %v430 = vsel %vm111, %v426, %v423
  %v431 = vsel %vm128, 1, 0
  %v432 = vsel %vm129, 1, 0
  %v433 = vsel %vm130, 1, 0
  %v434 = vsel %vm131, 1, 0
  %vm435 = vcmp.eq.s32.totalorder %v431, 1
  %vm436 = vcmp.eq.s32.totalorder %v432, 1
  %vm437 = vcmp.eq.s32.totalorder %v433, 1
  %vm438 = vcmp.eq.s32.totalorder %v434, 1
  %v439 = vsel %vm435, %v430, 0.0
  %v440 = vsel %vm436, %v429, 0.0
  %v441 = vsel %vm437, %v428, 0.0
  %v442 = vsel %vm438, %v427, 0.0
  %v443 = vrot.slane %v399, 1
  %v444 = vrot.slane %v400, 1
  %v445 = vrot.slane %v401, 1
  %v446 = vrot.slane %v402, 1
  %v447 = vsel %vm140, %v445, %v446
  %v448 = vsel %vm140, %v444, %v445
  %v449 = vsel %vm140, %v443, %v444
  %v450 = vsel %vm140, %v446, %v443
  %v451 = vsel %vm157, 1, 0
  %v452 = vsel %vm158, 1, 0
  %v453 = vsel %vm159, 1, 0
  %v454 = vsel %vm160, 1, 0
  %vm455 = vcmp.eq.s32.totalorder %v451, 1
  %vm456 = vcmp.eq.s32.totalorder %v452, 1
  %vm457 = vcmp.eq.s32.totalorder %v453, 1
  %vm458 = vcmp.eq.s32.totalorder %v454, 1
  %v459 = vsel %vm455, %v449, 0.0
  %v460 = vsel %vm456, %v448, 0.0
  %v461 = vsel %vm457, %v447, 0.0
  %v462 = vsel %vm458, %v450, 0.0
  %v463 = vrot.slane %v399, 2
  %v464 = vrot.slane %v400, 2
  %v465 = vrot.slane %v401, 2
  %v466 = vrot.slane %v402, 2
  %v467 = vsel %vm169, %v465, %v466
  %v468 = vsel %vm169, %v464, %v465
  %v469 = vsel %vm169, %v463, %v464
  %v470 = vsel %vm169, %v466, %v463
  %v471 = vsel %vm186, 1, 0
  %v472 = vsel %vm187, 1, 0
  %v473 = vsel %vm188, 1, 0
  %v474 = vsel %vm189, 1, 0
  %vm475 = vcmp.eq.s32.totalorder %v471, 1
  %vm476 = vcmp.eq.s32.totalorder %v472, 1
  %vm477 = vcmp.eq.s32.totalorder %v473, 1
  %vm478 = vcmp.eq.s32.totalorder %v474, 1
  %v479 = vsel %vm475, %v469, 0.0
  %v480 = vsel %vm476, %v468, 0.0
  %v481 = vsel %vm477, %v467, 0.0
  %v482 = vsel %vm478, %v470, 0.0
  %487 = vrot.lane.b32.xlu0 %v439, 12
  %v488 = vpop.permute.xlu0 %487
  %489 = vrot.lane.b32.xlu0 %v440, 12
  %v490 = vpop.permute.xlu0 %489
  %491 = vrot.lane.b32.xlu0 %v441, 12
  %v492 = vpop.permute.xlu0 %491
  %493 = vrot.lane.b32.xlu0 %v442, 12
  %v494 = vpop.permute.xlu0 %493
  %503 = vrot.lane.b32.xlu0 %v399, 24
  %v504 = vpop.permute.xlu0 %503
  %505 = vrot.lane.b32.xlu0 %v400, 24
  %v506 = vpop.permute.xlu0 %505
  %507 = vrot.lane.b32.xlu0 %v401, 24
  %v508 = vpop.permute.xlu0 %507
  %509 = vrot.lane.b32.xlu0 %v402, 24
  %v510 = vpop.permute.xlu0 %509
  %519 = vrot.lane.b32.xlu0 %v459, 36
  %v520 = vpop.permute.xlu0 %519
  %521 = vrot.lane.b32.xlu0 %v460, 36
  %v522 = vpop.permute.xlu0 %521
  %523 = vrot.lane.b32.xlu0 %v461, 36
  %v524 = vpop.permute.xlu0 %523
  %525 = vrot.lane.b32.xlu0 %v462, 36
  %v526 = vpop.permute.xlu0 %525
  %535 = vrot.lane.b32.xlu0 %v479, 48
  %v536 = vpop.permute.xlu0 %535
  %537 = vrot.lane.b32.xlu0 %v480, 48
  %v538 = vpop.permute.xlu0 %537
  %539 = vrot.lane.b32.xlu0 %v481, 48
  %v540 = vpop.permute.xlu0 %539
  %541 = vrot.lane.b32.xlu0 %v482, 48
  %v542 = vpop.permute.xlu0 %541
  %v547 = vsel %vm355, %v419, %v488
  %v548 = vsel %vm355, %v420, %v490
  %v549 = vsel %vm355, %v421, %v492
  %v550 = vsel %vm355, %v422, %v494
  %vm551 = vcmask 195584
  %v552 = vsel %vm551, %v547, %v504
  %v553 = vsel %vm551, %v548, %v506
  %v554 = vsel %vm551, %v549, %v508
  %v555 = vsel %vm551, %v550, %v510
  %vm556 = vcmask 293888
  %v557 = vsel %vm556, %v552, %v520
  %v558 = vsel %vm556, %v553, %v522
  %v559 = vsel %vm556, %v554, %v524
  %v560 = vsel %vm556, %v555, %v526
  %vm561 = vcmask 392192
  %v562 = vsel %vm561, %v557, %v536
  %v563 = vsel %vm561, %v558, %v538
  %v564 = vsel %vm561, %v559, %v540
  %v565 = vsel %vm561, %v560, %v542
  %v566 = vpack.c.bf16 %v563, %v562
  %v567 = vpack.c.bf16 %v565, %v564
  %v568 = vld [vmem:[%s2] sm:$0xf]
  %v569 = vld [vmem:[%s2 + $0x4] sm:$0xf]
  %v570 = vld [vmem:[%s2 + $0x8] sm:$0xf]
  %v571 = vld [vmem:[%s2 + $0xc] sm:$0xf]
  %v572 = vld [vmem:[%s2 + $0x10] sm:$0xf]
  %v573 = vld [vmem:[%s2 + $0x14] sm:$0xf]
  %v574 = vld [vmem:[%s2 + $0x18] sm:$0xf]
  %v575 = vld [vmem:[%s2 + $0x1c] sm:$0x3]
  %v584 = vunpack.c.l.b16 %v568
  %v585 = vunpack.c.l.b16 %v569
  %v586 = vunpack.c.l.b16 %v570
  %v587 = vunpack.c.l.b16 %v571
  %v588 = vunpack.c.l.b16 %v572
  %v589 = vunpack.c.l.b16 %v573
  %v590 = vunpack.c.l.b16 %v574
  %v591 = vunpack.c.l.b16 %v575
  %v592 = vpack.c.b16 %v585, %v584
  %v593 = vpack.c.b16 %v587, %v586
  %v594 = vpack.c.b16 %v589, %v588
  %v595 = vpack.c.b16 %v591, %v590
  %vm599 = vcmask 490496
  %v601 = vsel %vm599, %v566, 0
  %v604 = vsel %vm599, %v567, 0
  %vm606 = vcmask 1045504
  %v608 = vsel %vm606, %v595, 0
  %610 = vmatprep.subr.bf16.mxu0 0
  %611 = vmatpush1.bf16.msra.mxu0 %v592
  %612 = vmatprep.subr.bf16.mxu0 0
  %613 = vmatpush1.bf16.msra.mxu0 %v593
  %614 = vmatprep.subr.bf16.mxu0 0
  %615 = vmatpush1.bf16.msra.mxu0 %v594
  %616 = vmatprep.subr.bf16.mxu0 0
  %617 = vmatpush1.bf16.msra.mxu0 %v608
  %618 = vmatprep.subr.bf16.mxu0 0
  %619 = vmatpush1.bf16.msra.mxu0 0
  %620 = vmatprep.subr.bf16.mxu0 0
  %621 = vmatpush1.bf16.msra.mxu0 0
  %622 = vmatprep.subr.bf16.mxu0 0
  %623 = vmatpush1.bf16.msra.mxu0 0
  %624 = vmatprep.subr.bf16.mxu0 0
  %625 = vmatpush1.bf16.msra.mxu0 0
  %626 = vmatprep.subr.bf16.mxu0 0
  %627 = vmatpush1.bf16.msra.mxu0 0
  %628 = vmatprep.subr.bf16.mxu0 0
  %629 = vmatpush1.bf16.msra.mxu0 0
  %630 = vmatprep.subr.bf16.mxu0 0
  %631 = vmatpush1.bf16.msra.mxu0 0
  %632 = vmatprep.subr.bf16.mxu0 0
  %633 = vmatpush1.bf16.msra.mxu0 0
  %634 = vmatprep.subr.bf16.mxu0 0
  %635 = vmatpush1.bf16.msra.mxu0 0
  %636 = vmatprep.subr.bf16.mxu0 0
  %637 = vmatpush1.bf16.msra.mxu0 0
  %638 = vmatprep.subr.bf16.mxu0 0
  %639 = vmatpush1.bf16.msra.mxu0 0
  %640 = vmatprep.subr.bf16.mxu0 0
  %641 = vmatpush1.bf16.msra.mxu0 0
  %642 = vmatprep.mubr.bf16.mxu0 0
  %643 = vmatmul.mubr.bf16.gmra.mrb[0].mxu0 %v601
  %v644 = vpop.f32.mrb[0].mxu0
  %v645 = vadd.f32 0.0, %v644
  %v646 = vpop.f32.mrb[0].mxu0
  %v647 = vpop.f32.mrb[0].mxu0
  %v648 = vadd.f32 0.0, %v647
  %v649 = vpop.f32.mrb[0].mxu0
  %650 = vmatprep.mubr.bf16.mxu0 0
  %651 = vmatmul.mubr.bf16.gmra.mrb[0].mxu0 %v604
  %v652 = vpop.f32.mrb[0].mxu0
  %v653 = vadd.f32 0.0, %v652
  %v654 = vpop.f32.mrb[0].mxu0
  %v655 = vpop.f32.mrb[0].mxu0
  %v656 = vadd.f32 0.0, %v655
  %v657 = vpop.f32.mrb[0].mxu0
  %658 = vdwg.mxu0
  %v659 = vsel %vm355, %v645, 0.0
  %v660 = vsel %vm355, %v648, 0.0
  %v661 = vadd.f32 %v659, %v660
  %v662 = vsel %vm355, %v653, 0.0
  %v663 = vadd.f32 %v661, %v662
  %v664 = vsel %vm355, %v656, 0.0
  %v665 = vadd.f32 %v663, %v664
  %v666 = vrot.slane %v665, 4
  %v667 = vadd.f32 %v665, %v666
  %v668 = vrot.slane %v667, 2
  %v669 = vadd.f32 %v667, %v668
  %v670 = vrot.slane %v669, 1
  %v671 = vadd.f32 %v669, %v670
  %v672 = vmul.f32 %v671, %v369
  %v673 = vsub.f32 %v645, %v672
  %v674 = vsub.f32 %v648, %v672
  %v675 = vsub.f32 %v653, %v672
  %v676 = vsub.f32 %v656, %v672
  %v677 = vmul.f32 %v673, %v673
  %v678 = vmul.f32 %v674, %v674
  %v679 = vmul.f32 %v675, %v675
  %v680 = vmul.f32 %v676, %v676
  %v681 = vsel %vm355, %v677, 0.0
  %v682 = vsel %vm355, %v678, 0.0
  %v683 = vadd.f32 %v681, %v682
  %v684 = vsel %vm355, %v679, 0.0
  %v685 = vadd.f32 %v683, %v684
  %v686 = vsel %vm355, %v680, 0.0
  %v687 = vadd.f32 %v685, %v686
  %v688 = vrot.slane %v687, 4
  %v689 = vadd.f32 %v687, %v688
  %v690 = vrot.slane %v689, 2
  %v691 = vadd.f32 %v689, %v690
  %v692 = vrot.slane %v691, 1
  %v693 = vadd.f32 %v691, %v692
  %v694 = vmul.f32 %v693, %v369
  %v695 = vadd.f32 %v694, 1e-05
  %v696 = vrsqrt.pop %v695
  %v697 = vmul.f32 %v673, %v696
  %v698 = vmul.f32 %v674, %v696
  %v699 = vmul.f32 %v675, %v696
  %v700 = vmul.f32 %v676, %v696
  %v701 = vmax.f32 %v697, 0.0
  %v702 = vmax.f32 %v698, 0.0
  %v703 = vmax.f32 %v699, 0.0
  %v704 = vmax.f32 %v700, 0.0
  %v705 = vrot.slane %v701, 7
  %v706 = vrot.slane %v702, 7
  %v707 = vrot.slane %v703, 7
  %v708 = vrot.slane %v704, 7
  %v709 = vsel %vm111, %v707, %v708
  %v710 = vsel %vm111, %v706, %v707
  %v711 = vsel %vm111, %v705, %v706
  %v712 = vsel %vm111, %v708, %v705
  %v713 = vsel %vm435, %v712, 0.0
  %v714 = vsel %vm436, %v711, 0.0
  %v715 = vsel %vm437, %v710, 0.0
  %v716 = vsel %vm438, %v709, 0.0
  %v717 = vrot.slane %v701, 1
  %v718 = vrot.slane %v702, 1
  %v719 = vrot.slane %v703, 1
  %v720 = vrot.slane %v704, 1
  %v721 = vsel %vm140, %v719, %v720
  %v722 = vsel %vm140, %v718, %v719
  %v723 = vsel %vm140, %v717, %v718
  %v724 = vsel %vm140, %v720, %v717
  %v725 = vsel %vm455, %v723, 0.0
  %v726 = vsel %vm456, %v722, 0.0
  %v727 = vsel %vm457, %v721, 0.0
  %v728 = vsel %vm458, %v724, 0.0
  %733 = vrot.lane.b32.xlu0 %v701, 12
  %v734 = vpop.permute.xlu0 %733
  %735 = vrot.lane.b32.xlu0 %v702, 12
  %v736 = vpop.permute.xlu0 %735
  %737 = vrot.lane.b32.xlu0 %v703, 12
  %v738 = vpop.permute.xlu0 %737
  %739 = vrot.lane.b32.xlu0 %v704, 12
  %v740 = vpop.permute.xlu0 %739
  %749 = vrot.lane.b32.xlu0 %v725, 24
  %v750 = vpop.permute.xlu0 %749
  %751 = vrot.lane.b32.xlu0 %v726, 24
  %v752 = vpop.permute.xlu0 %751
  %753 = vrot.lane.b32.xlu0 %v727, 24
  %v754 = vpop.permute.xlu0 %753
  %755 = vrot.lane.b32.xlu0 %v728, 24
  %v756 = vpop.permute.xlu0 %755
  %v761 = vsel %vm355, %v713, %v734
  %v762 = vsel %vm355, %v714, %v736
  %v763 = vsel %vm355, %v715, %v738
  %v764 = vsel %vm355, %v716, %v740
  %v765 = vsel %vm551, %v761, %v750
  %v766 = vsel %vm551, %v762, %v752
  %v767 = vsel %vm551, %v763, %v754
  %v768 = vsel %vm551, %v764, %v756
  %v769 = vpack.c.bf16 %v766, %v765
  %v770 = vpack.c.bf16 %v768, %v767
  %v771 = vld [vmem:[%s3] sm:$0xf]
  %v772 = vld [vmem:[%s3 + $0x4] sm:$0xf]
  %v773 = vld [vmem:[%s3 + $0x8] sm:$0xf]
  %v774 = vld [vmem:[%s3 + $0xc] sm:$0xf]
  %v775 = vld [vmem:[%s3 + $0x10] sm:$0x3]
  %v781 = vunpack.c.l.b16 %v771
  %v782 = vunpack.c.l.b16 %v772
  %v783 = vunpack.c.l.b16 %v773
  %v784 = vunpack.c.l.b16 %v774
  %v785 = vunpack.c.l.b16 %v775
  %v786 = vpack.c.b16 %v782, %v781
  %v787 = vpack.c.b16 %v784, %v783
  %v788 = vpack.c.b16 %v785, %v785
  %v792 = vsel %vm556, %v769, 0
  %v795 = vsel %vm556, %v770, 0
  %vm797 = vcmask 1041408
  %v799 = vsel %vm797, %v788, 0
  %801 = vmatprep.subr.bf16.mxu0 0
  %802 = vmatpush1.bf16.msra.mxu0 %v786
  %803 = vmatprep.subr.bf16.mxu0 0
  %804 = vmatpush1.bf16.msra.mxu0 %v787
  %805 = vmatprep.subr.bf16.mxu0 0
  %806 = vmatpush1.bf16.msra.mxu0 %v799
  %807 = vmatprep.subr.bf16.mxu0 0
  %808 = vmatpush1.bf16.msra.mxu0 0
  %809 = vmatprep.subr.bf16.mxu0 0
  %810 = vmatpush1.bf16.msra.mxu0 0
  %811 = vmatprep.subr.bf16.mxu0 0
  %812 = vmatpush1.bf16.msra.mxu0 0
  %813 = vmatprep.subr.bf16.mxu0 0
  %814 = vmatpush1.bf16.msra.mxu0 0
  %815 = vmatprep.subr.bf16.mxu0 0
  %816 = vmatpush1.bf16.msra.mxu0 0
  %817 = vmatprep.subr.bf16.mxu0 0
  %818 = vmatpush1.bf16.msra.mxu0 0
  %819 = vmatprep.subr.bf16.mxu0 0
  %820 = vmatpush1.bf16.msra.mxu0 0
  %821 = vmatprep.subr.bf16.mxu0 0
  %822 = vmatpush1.bf16.msra.mxu0 0
  %823 = vmatprep.subr.bf16.mxu0 0
  %824 = vmatpush1.bf16.msra.mxu0 0
  %825 = vmatprep.subr.bf16.mxu0 0
  %826 = vmatpush1.bf16.msra.mxu0 0
  %827 = vmatprep.subr.bf16.mxu0 0
  %828 = vmatpush1.bf16.msra.mxu0 0
  %829 = vmatprep.subr.bf16.mxu0 0
  %830 = vmatpush1.bf16.msra.mxu0 0
  %831 = vmatprep.subr.bf16.mxu0 0
  %832 = vmatpush1.bf16.msra.mxu0 0
  %833 = vmatprep.mubr.bf16.mxu0 0
  %834 = vmatmul.mubr.bf16.gmra.mrb[0].mxu0 %v792
  %v835 = vpop.f32.mrb[0].mxu0
  %v836 = vadd.f32 0.0, %v835
  %v837 = vpop.f32.mrb[0].mxu0
  %v838 = vpop.f32.mrb[0].mxu0
  %v839 = vadd.f32 0.0, %v838
  %v840 = vpop.f32.mrb[0].mxu0
  %841 = vmatprep.mubr.bf16.mxu0 0
  %842 = vmatmul.mubr.bf16.gmra.mrb[0].mxu0 %v795
  %v843 = vpop.f32.mrb[0].mxu0
  %v844 = vadd.f32 0.0, %v843
  %v845 = vpop.f32.mrb[0].mxu0
  %v846 = vpop.f32.mrb[0].mxu0
  %v847 = vadd.f32 0.0, %v846
  %v848 = vpop.f32.mrb[0].mxu0
  %849 = vdwg.mxu0
  %vm850 = vcmask 64512
  %v851 = vsel %vm850, %v836, 0.0
  %v852 = vsel %vm850, %v839, 0.0
  %v853 = vadd.f32 %v851, %v852
  %v854 = vsel %vm850, %v844, 0.0
  %v855 = vadd.f32 %v853, %v854
  %v856 = vsel %vm850, %v847, 0.0
  %v857 = vadd.f32 %v855, %v856
  %v858 = vrot.slane %v857, 4
  %v859 = vadd.f32 %v857, %v858
  %v860 = vrot.slane %v859, 2
  %v861 = vadd.f32 %v859, %v860
  %v862 = vrot.slane %v861, 1
  %v863 = vadd.f32 %v861, %v862
  %v864 = vmul.f32 %v863, %v369
  %v865 = vsub.f32 %v836, %v864
  %v866 = vsub.f32 %v839, %v864
  %v867 = vsub.f32 %v844, %v864
  %v868 = vsub.f32 %v847, %v864
  %v869 = vmul.f32 %v865, %v865
  %v870 = vmul.f32 %v866, %v866
  %v871 = vmul.f32 %v867, %v867
  %v872 = vmul.f32 %v868, %v868
  %v873 = vsel %vm850, %v869, 0.0
  %v874 = vsel %vm850, %v870, 0.0
  %v875 = vadd.f32 %v873, %v874
  %v876 = vsel %vm850, %v871, 0.0
  %v877 = vadd.f32 %v875, %v876
  %v878 = vsel %vm850, %v872, 0.0
  %v879 = vadd.f32 %v877, %v878
  %v880 = vrot.slane %v879, 4
  %v881 = vadd.f32 %v879, %v880
  %v882 = vrot.slane %v881, 2
  %v883 = vadd.f32 %v881, %v882
  %v884 = vrot.slane %v883, 1
  %v885 = vadd.f32 %v883, %v884
  %v886 = vmul.f32 %v885, %v369
  %v887 = vadd.f32 %v886, 1e-05
  %v888 = vrsqrt.pop %v887
  %v889 = vmul.f32 %v865, %v888
  %v890 = vmul.f32 %v866, %v888
  %v891 = vmul.f32 %v867, %v888
  %v892 = vmul.f32 %v868, %v888
  %v893 = vld [vmem:[%s4] sm:$0x1]
  %v895 = vlaneseq
  %v896 = vshrl.u32 %v895, 7
  %v897 = vsub.s32 0, %v896
  %v898 = vrot.slane %v893, %v897
  %v900 = vmul.f32 %v262, %v898
  %v901 = vmul.f32 %v267, %v898
  %v902 = vmul.f32 %v272, %v898
  %v903 = vmul.f32 %v277, %v898
  %v904 = vsel %vm850, %v900, 0.0
  %v905 = vsel %vm850, %v901, 0.0
  %v906 = vadd.f32 %v904, %v905
  %v907 = vsel %vm850, %v902, 0.0
  %v908 = vadd.f32 %v906, %v907
  %v909 = vsel %vm850, %v903, 0.0
  %v910 = vadd.f32 %v908, %v909
  %v911 = vrot.slane %v910, 4
  %v912 = vadd.f32 %v910, %v911
  %v913 = vrot.slane %v912, 2
  %v914 = vadd.f32 %v912, %v913
  %v915 = vrot.slane %v914, 1
  %v916 = vadd.f32 %v914, %v915
  %v917 = vmul.f32 %v916, %v369
  %v918 = vsub.f32 %v900, %v917
  %v919 = vsub.f32 %v901, %v917
  %v920 = vsub.f32 %v902, %v917
  %v921 = vsub.f32 %v903, %v917
  %v922 = vmul.f32 %v918, %v918
  %v923 = vmul.f32 %v919, %v919
  %v924 = vmul.f32 %v920, %v920
  %v925 = vmul.f32 %v921, %v921
  %v926 = vsel %vm850, %v922, 0.0
  %v927 = vsel %vm850, %v923, 0.0
  %v928 = vadd.f32 %v926, %v927
  %v929 = vsel %vm850, %v924, 0.0
  %v930 = vadd.f32 %v928, %v929
  %v931 = vsel %vm850, %v925, 0.0
  %v932 = vadd.f32 %v930, %v931
  %v933 = vrot.slane %v932, 4
  %v934 = vadd.f32 %v932, %v933
  %v935 = vrot.slane %v934, 2
  %v936 = vadd.f32 %v934, %v935
  %v937 = vrot.slane %v936, 1
  %v938 = vadd.f32 %v936, %v937
  %v939 = vmul.f32 %v938, %v369
  %v940 = vadd.f32 %v939, 1e-05
  %v941 = vrsqrt.pop %v940
  %v942 = vmul.f32 %v918, %v941
  %v943 = vmul.f32 %v919, %v941
  %v944 = vmul.f32 %v920, %v941
  %v945 = vmul.f32 %v921, %v941
  %v946 = vadd.f32 %v889, %v942
  %v947 = vadd.f32 %v890, %v943
  %v948 = vadd.f32 %v891, %v944
  %v949 = vadd.f32 %v892, %v945
  %v950 = vmax.f32 %v946, 0.0
  %v951 = vmax.f32 %v947, 0.0
  %v952 = vmax.f32 %v948, 0.0
  %v953 = vmax.f32 %v949, 0.0
  %954 = vst.msk [vmem:[%s5] sm:$0xff] %vm850, %v950
  %955 = vst.msk [vmem:[%s5 + $0x8] sm:$0xff] %vm850, %v951
  %956 = vst.msk [vmem:[%s5 + $0x10] sm:$0xff] %vm850, %v952
  %957 = vst.msk [vmem:[%s5 + $0x18] sm:$0xff] %vm850, %v953
  // Predicated region
  $region22: #{forward.2} parent=0 // pred_check
    _
  $region23: #{forward.2} parent=0 // pred_check_branch
    %959 = sbr.rel (0) target = $region25
  $region24: #{forward.2} parent=0 // pred_region
    _
  $region25: #{forward.2} parent=0 // pred_fallthru
    _
  // Predicated region
  $region26: #{forward.2} parent=0 // pred_check
    _
  $region27: #{forward.2} parent=0 // pred_check_branch
    %961 = sbr.rel (0) target = $region29
  $region28: #{forward.2} parent=0 // pred_region
    _
  $region29: #{forward.2} parent=0 // pred_fallthru
    _

</llo_original>
